<compile_context>
chip_gen: v6e
topology: v6e:2x2x1
jax: 0.10.0
libtpu: 0.0.40
codegen_flags: <defaults>
</compile_context>

<pallas_src>
import functools

import jax
import jax.numpy as jnp
import numpy as np
from jax import lax
from jax.experimental import pallas as pl
from jax.experimental.pallas import tpu as pltpu

EPS = 1e-5  # nn.BatchNorm1d default eps


# ------------------------------ sizing helpers --------------------------------------


def _vmem_limit_bytes():
    """Generation-aware scoped-VMEM request: ~90-100 MiB on 128-MiB parts, ~45 on 64."""
    cap = None
    try:
        cap = getattr(pltpu.get_tpu_info(), "vmem_capacity_bytes", None)
    except Exception:
        cap = None
    if not cap:
        cap = 64 * 1024 * 1024  # conservative fallback (v7x-sized)
    return int(min(100 * 1024 * 1024, 0.7 * cap))


def _largest_divisor_leq(n, cap):
    cap = max(1, min(n, cap))
    for d in range(cap, 0, -1):
        if n % d == 0:
            return d
    return 1


def _pick_batch_block(n, cin, cout, length, itemsize, vmem_budget, max_unroll=16):
    """Largest Nb dividing n that fits the VMEM budget (double-buffered blocks +
    f32 temporaries of the unrolled conv bodies), capped for unroll sanity."""
    per_elem = 2 * (cin + cout) * length * itemsize + (cin + 4 * cout) * length * 4
    cap = max(1, (vmem_budget // 2) // max(per_elem, 1))
    return _largest_divisor_leq(n, min(cap, max_unroll))


# ------------------------------ in-kernel conv ---------------------------------------


def _conv_k3(x, w_prev, w_cur, w_next):
    """k=3, pad=1 Conv1d as three accumulated per-tap MXU dots.

    x: (C, L) compute dtype; taps: (Cout, C).  Returns (Cout, L) f32.
    No 3C im2col slab is materialized; each shifted view is a single small copy.
    """
    c, length = x.shape
    zcol = jnp.zeros((c, 1), x.dtype)
    x_prev = jnp.concatenate([zcol, x[:, : length - 1]], axis=1)  # x[:, l-1], zero at l=0
    x_next = jnp.concatenate([x[:, 1:], zcol], axis=1)            # x[:, l+1], zero at l=L-1
    y = jnp.dot(w_cur, x, preferred_element_type=jnp.float32)
    y = y + jnp.dot(w_prev, x_prev, preferred_element_type=jnp.float32)
    y = y + jnp.dot(w_next, x_next, preferred_element_type=jnp.float32)
    return y


# --------------------------------- kernels -------------------------------------------


def _conv1_stats_kernel(x_ref, w1_ref, stats_ref, acc_ref):
    """Pass A: raw conv1 over Nb batch elements; accumulate per-core BN1 stats."""
    n = pl.program_id(1)
    nb = x_ref.shape[0]
    cout = w1_ref.shape[1]

    @pl.when(n == 0)
    def _():
        acc_ref[...] = jnp.zeros_like(acc_ref)

    w_p, w_c, w_n = w1_ref[0], w1_ref[1], w1_ref[2]
    s = jnp.zeros((cout, 1), jnp.float32)
    q = jnp.zeros((cout, 1), jnp.float32)
    # nb is a small static block size: static unrolled loop == fori_loop(unroll=True).
    for b in range(nb):
        y = _conv_k3(x_ref[b], w_p, w_c, w_n)                  # (Cout, L) f32
        s = s + jnp.sum(y, axis=1, keepdims=True)
        q = q + jnp.sum(y * y, axis=1, keepdims=True)
    acc_ref[...] += jnp.concatenate([s, q], axis=1)

    @pl.when(n == pl.num_programs(1) - 1)
    def _():
        stats_ref[0] = acc_ref[...]                            # single narrow write


def _bn1_conv2_stats_kernel(x_ref, w1_ref, sc1_ref, sh1_ref, w2_ref,
                            y2_ref, stats_ref, acc_ref, *, compute_dtype):
    """Pass B: recompute conv1, apply BN1 affine + ReLU, conv2 -> y2; BN2 stats."""
    n = pl.program_id(1)
    nb = x_ref.shape[0]
    cout = w2_ref.shape[1]

    @pl.when(n == 0)
    def _():
        acc_ref[...] = jnp.zeros_like(acc_ref)

    w1p, w1c, w1n = w1_ref[0], w1_ref[1], w1_ref[2]
    w2p, w2c, w2n = w2_ref[0], w2_ref[1], w2_ref[2]
    scale1 = sc1_ref[...]                                      # (Cout, 1) f32
    shift1 = sh1_ref[...]

    s = jnp.zeros((cout, 1), jnp.float32)
    q = jnp.zeros((cout, 1), jnp.float32)
    for b in range(nb):
        y1 = _conv_k3(x_ref[b], w1p, w1c, w1n)                 # recompute conv1 (f32)
        h = jnp.maximum(y1 * scale1 + shift1, 0.0).astype(compute_dtype)
        y2 = _conv_k3(h, w2p, w2c, w2n)                        # conv2 (f32 acc)
        y2_ref[b] = y2.astype(y2_ref.dtype)
        s = s + jnp.sum(y2, axis=1, keepdims=True)
        q = q + jnp.sum(y2 * y2, axis=1, keepdims=True)
    acc_ref[...] += jnp.concatenate([s, q], axis=1)

    @pl.when(n == pl.num_programs(1) - 1)
    def _():
        stats_ref[0] = acc_ref[...]


def _bn2_relu_kernel(y2_ref, sc2_ref, sh2_ref, x_ref):
    """Pass C: apply BN2 affine + ReLU to the whole (Nb, Cout, L) block."""
    h = y2_ref[...].astype(jnp.float32) * sc2_ref[...] + sh2_ref[...]
    x_ref[...] = jnp.maximum(h, 0.0).astype(x_ref.dtype)


# --------------------------------- wrapper --------------------------------------------


@functools.partial(jax.jit, static_argnames=("compute_dtype", "out_dtype"))
def encoder_block(x_ncl, w1, b1, g1, be1, w2, b2, g2, be2,
                  compute_dtype=jnp.bfloat16, out_dtype=jnp.float32):
    """x_ncl: (N, Cin, L) float32, PyTorch NCL layout.

    Returns (x, p) in PyTorch layout: x: (N, Cout, L), p: (N, Cout, L//2).
    Conv weights are PyTorch layout: w1 (Cout, Cin, 3), w2 (Cout, Cout, 3).
    """
    N, Cin, L = x_ncl.shape
    Cout = w1.shape[0]
    assert L % 2 == 0
    half = L // 2
    f32 = jnp.float32
    inv_count = 1.0 / float(N * L)  # BN reduces over (batch, length)

    vmem_limit = _vmem_limit_bytes()
    itemsize = jnp.dtype(compute_dtype).itemsize

    # v7x: give the second TensorCore work in passes A/B via a leading "parallel" core
    # axis and per-core partial BN stats (reduced below). Harmless on 1-TC v5e/v6e.
    ncores = 2 if N % 2 == 0 else 1
    nper = N // ncores
    nb = _pick_batch_block(nper, Cin, Cout, L, itemsize, vmem_limit)
    nsteps = nper // nb

    # Conv weights (Cout, C, K) -> per-tap stack (3, Cout, C).
    w1_taps = jnp.transpose(w1, (2, 0, 1)).astype(compute_dtype)
    w2_taps = jnp.transpose(w2, (2, 0, 1)).astype(compute_dtype)
    # Conv biases dropped: a per-channel pre-BN bias cancels under training-mode BN.
    del b1, b2

    xc = x_ncl.astype(compute_dtype)  # NCL kept end-to-end (length on the lane axis)

    x_spec = pl.BlockSpec((nb, Cin, L), lambda c, n: (c * nsteps + n, 0, 0))
    y2_spec = pl.BlockSpec((nb, Cout, L), lambda c, n: (c * nsteps + n, 0, 0))
    w1_spec = pl.BlockSpec((3, Cout, Cin), lambda c, n: (0, 0, 0))
    w2_spec = pl.BlockSpec((3, Cout, Cout), lambda c, n: (0, 0, 0))
    col_spec = pl.BlockSpec((Cout, 1), lambda c, n: (0, 0))
    stats_spec = pl.BlockSpec((1, Cout, 2), lambda c, n: (c, 0, 0))

    def cparams(sem):
        return pltpu.CompilerParams(dimension_semantics=sem,
                                    vmem_limit_bytes=vmem_limit)

    def _affine(stats, gamma, beta):
        mean = stats[:, 0] * inv_count
        var = stats[:, 1] * inv_count - mean * mean   # one-pass biased variance (f32 sums)
        scale = gamma.astype(f32) * lax.rsqrt(var + EPS)
        shift = beta.astype(f32) - mean * scale
        return scale.reshape(Cout, 1), shift.reshape(Cout, 1)

    # ---- pass A: conv1 (raw) -> per-core BN1 partial stats only (no y1 stored) ----
    stats1_parts = pl.pallas_call(
        _conv1_stats_kernel,
        grid=(ncores, nsteps),
        in_specs=[x_spec, w1_spec],
        out_specs=stats_spec,
        out_shape=jax.ShapeDtypeStruct((ncores, Cout, 2), f32),
        scratch_shapes=[pltpu.VMEM((Cout, 2), f32)],
        compiler_params=cparams(("parallel", "arbitrary")),
    )(xc, w1_taps)
    scale1, shift1 = _affine(jnp.sum(stats1_parts, axis=0), g1, be1)

    # ---- pass B: recompute conv1, BN1+ReLU, conv2 -> y2; per-core BN2 partial stats ----
    y2, stats2_parts = pl.pallas_call(
        functools.partial(_bn1_conv2_stats_kernel, compute_dtype=compute_dtype),
        grid=(ncores, nsteps),
        in_specs=[x_spec, w1_spec, col_spec, col_spec, w2_spec],
        out_specs=(y2_spec, stats_spec),
        out_shape=(jax.ShapeDtypeStruct((N, Cout, L), compute_dtype),
                   jax.ShapeDtypeStruct((ncores, Cout, 2), f32)),
        scratch_shapes=[pltpu.VMEM((Cout, 2), f32)],
        compiler_params=cparams(("parallel", "arbitrary")),
    )(xc, w1_taps, scale1, shift1, w2_taps)
    scale2, shift2 = _affine(jnp.sum(stats2_parts, axis=0), g2, be2)

    # ---- pass C: BN2 + ReLU -> x (fully parallel over batch blocks) ----
    nbc = _pick_batch_block(N, Cout, Cout, L, itemsize, vmem_limit)
    if N >= 2:
        nbc = min(nbc, _largest_divisor_leq(N, N // 2))  # >= 2 grid steps for megacore
    x_out = pl.pallas_call(
        _bn2_relu_kernel,
        grid=(N // nbc,),
        in_specs=[pl.BlockSpec((nbc, Cout, L), lambda i: (i, 0, 0)),
                  pl.BlockSpec((Cout, 1), lambda i: (0, 0)),
                  pl.BlockSpec((Cout, 1), lambda i: (0, 0))],
        out_specs=pl.BlockSpec((nbc, Cout, L), lambda i: (i, 0, 0)),
        out_shape=jax.ShapeDtypeStruct((N, Cout, L), out_dtype),
        compiler_params=cparams(("parallel",)),
    )(y2, scale2, shift2)

    # MaxPool1d(2): pair-max over adjacent length positions, as one tiny XLA reduce on
    # the kernel output (stride-2 lane deinterleave is not portably lowerable in-kernel).
    p_out = jnp.max(x_out.reshape(N, Cout, half, 2), axis=-1)
    return x_out, p_out


# ------------------------------ pure-JAX reference -----------------------------------


def _reference(x, w1, b1, g1, be1, w2, b2, g2, be2):
    """Independent pure-JAX reference (NCL layout, lax conv, includes conv biases)."""
    def conv1d(x, w, b):
        y = lax.conv_general_dilated(x, w, window_strides=(1,), padding=[(1, 1)],
                                     dimension_numbers=('NCH', 'OIH', 'NCH'))
        return y + b[None, :, None]

    def bn(x, g, be):
        mean = jnp.mean(x, axis=(0, 2), keepdims=True)
        var = jnp.mean((x - mean) ** 2, axis=(0, 2), keepdims=True)
        return (x - mean) * lax.rsqrt(var + EPS) * g[None, :, None] + be[None, :, None]

    h = jnp.maximum(bn(conv1d(x, w1, b1), g1, be1), 0.0)
    h = jnp.maximum(bn(conv1d(h, w2, b2), g2, be2), 0.0)
    N, C, L = h.shape
    p = jnp.max(h.reshape(N, C, L // 2, 2), axis=-1)
    return h, p


if __name__ == "__main__":
    N, Cin, Cout, L = 2, 4, 8, 16

    key = jax.random.PRNGKey(0)
    keys = jax.random.split(key, 9)
    x = jax.random.normal(keys[0], (N, Cin, L), jnp.float32)
    w1 = 0.3 * jax.random.normal(keys[1], (Cout, Cin, 3), jnp.float32)
    b1 = 0.1 * jax.random.normal(keys[2], (Cout,), jnp.float32)
    g1 = 1.0 + 0.1 * jax.random.normal(keys[3], (Cout,), jnp.float32)
    be1 = 0.1 * jax.random.normal(keys[4], (Cout,), jnp.float32)
    w2 = 0.3 * jax.random.normal(keys[5], (Cout, Cout, 3), jnp.float32)
    b2 = 0.1 * jax.random.normal(keys[6], (Cout,), jnp.float32)
    g2 = 1.0 + 0.1 * jax.random.normal(keys[7], (Cout,), jnp.float32)
    be2 = 0.1 * jax.random.normal(keys[8], (Cout,), jnp.float32)

    args = (x, w1, b1, g1, be1, w2, b2, g2, be2)
    x_ref, p_ref = _reference(*args)

    # f32 compute path: tight check of the kernel logic (bias cancellation, one-pass
    # variance, recompute-conv1 consistency) against the full-precision reference.
    x32, p32 = encoder_block(*args, compute_dtype=jnp.float32)
    jax.block_until_ready((x32, p32))
    np.testing.assert_allclose(np.asarray(x32), np.asarray(x_ref), rtol=5e-4, atol=5e-4)
    np.testing.assert_allclose(np.asarray(p32), np.asarray(p_ref), rtol=5e-4, atol=5e-4)

    # Default bf16-MXU path: looser tolerance only because matmul operands are bf16.
    xbf, pbf = encoder_block(*args)
    jax.block_until_ready((xbf, pbf))
    np.testing.assert_allclose(np.asarray(xbf), np.asarray(x_ref), rtol=5e-2, atol=5e-2)
    np.testing.assert_allclose(np.asarray(pbf), np.asarray(p_ref), rtol=5e-2, atol=5e-2)

    assert x32.shape == (N, Cout, L) and p32.shape == (N, Cout, L // 2)
    print("KERNEL_OK")
</pallas_src>

<mosaic_0001>
module attributes {stable_mosaic.version = 11 : i64} {
  func.func @_conv1_stats_kernel(%arg0: i32, %arg1: i32, %arg2: memref<1x4x16xf32, #tpu.memory_space<vmem>>, %arg3: memref<3x8x4xf32, #tpu.memory_space<vmem>>, %arg4: memref<1x8x2xf32, #tpu.memory_space<vmem>>, %arg5: memref<8x2xf32, #tpu.memory_space<vmem>>) attributes {dimension_semantics = [#tpu.dimension_semantics<parallel>, #tpu.dimension_semantics<arbitrary>], iteration_bounds = array<i64: 2, 1>, scalar_prefetch = 0 : i64, scratch_operands = 1 : i64, tpu.core_type = #tpu.core_type<tc>, window_params = [{transform_indices = @transform_0, window_bounds = array<i64: 1, 4, 16>}, {pipeline_mode = #tpu.pipeline_mode<synchronous>, transform_indices = @transform_1, window_bounds = array<i64: 3, 8, 4>}, {transform_indices = @transform_2, window_bounds = array<i64: 1, 8, 2>}]} {
    %c0_i32 = arith.constant 0 : i32
    %0 = arith.cmpi eq, %arg1, %c0_i32 : i32
    %1 = arith.extui %0 : i1 to i32
    %c0_i32_0 = arith.constant 0 : i32
    %2 = arith.cmpi ne, %1, %c0_i32_0 : i32
    scf.if %2 {
      %cst_23 = arith.constant 0.000000e+00 : f32
      %37 = vector.broadcast %cst_23 : f32 to vector<8x2xf32>
      %c0_24 = arith.constant 0 : index
      %c0_25 = arith.constant 0 : index
      %38 = vector.load %arg5[%c0_24, %c0_25] : memref<8x2xf32, #tpu.memory_space<vmem>>, vector<8x2xf32>
      tpu.vector_store %arg5[%c0_24, %c0_25], %37 {strides = array<i32>} : memref<8x2xf32, #tpu.memory_space<vmem>>, vector<8x2xf32>,
    } else {
    }
    %c0 = arith.constant 0 : index
    %c0_1 = arith.constant 0 : index
    %c0_2 = arith.constant 0 : index
    %3 = vector.load %arg3[%c0, %c0_1, %c0_2] : memref<3x8x4xf32, #tpu.memory_space<vmem>>, vector<1x8x4xf32>
    %4 = vector.shape_cast %3 : vector<1x8x4xf32> to vector<8x4xf32>
    %c1 = arith.constant 1 : index
    %c0_3 = arith.constant 0 : index
    %c0_4 = arith.constant 0 : index
    %5 = vector.load %arg3[%c1, %c0_3, %c0_4] : memref<3x8x4xf32, #tpu.memory_space<vmem>>, vector<1x8x4xf32>
    %6 = vector.shape_cast %5 : vector<1x8x4xf32> to vector<8x4xf32>
    %c2 = arith.constant 2 : index
    %c0_5 = arith.constant 0 : index
    %c0_6 = arith.constant 0 : index
    %7 = vector.load %arg3[%c2, %c0_5, %c0_6] : memref<3x8x4xf32, #tpu.memory_space<vmem>>, vector<1x8x4xf32>
    %8 = vector.shape_cast %7 : vector<1x8x4xf32> to vector<8x4xf32>
    %cst = arith.constant 0.000000e+00 : f32
    %9 = vector.broadcast %cst : f32 to vector<8x1xf32>
    %cst_7 = arith.constant 0.000000e+00 : f32
    %10 = vector.broadcast %cst_7 : f32 to vector<8x1xf32>
    %c0_8 = arith.constant 0 : index
    %c0_9 = arith.constant 0 : index
    %c0_10 = arith.constant 0 : index
    %11 = vector.load %arg2[%c0_8, %c0_9, %c0_10] : memref<1x4x16xf32, #tpu.memory_space<vmem>>, vector<1x4x16xf32>
    %12 = vector.shape_cast %11 : vector<1x4x16xf32> to vector<4x16xf32>
    %cst_11 = arith.constant 0.000000e+00 : f32
    %13 = vector.broadcast %cst_11 : f32 to vector<4x1xf32>
    %14 = vector.extract_strided_slice %12 {offsets = [0, 0], sizes = [4, 15], strides = [1, 1]} : vector<4x16xf32> to vector<4x15xf32>
    %15 = tpu.concatenate %13, %14 in 1 : vector<4x1xf32>, vector<4x15xf32> -> vector<4x16xf32>
    %16 = vector.extract_strided_slice %12 {offsets = [0, 1], sizes = [4, 15], strides = [1, 1]} : vector<4x16xf32> to vector<4x15xf32>
    %17 = tpu.concatenate %16, %13 in 1 : vector<4x15xf32>, vector<4x1xf32> -> vector<4x16xf32>
    %cst_12 = arith.constant dense<0.000000e+00> : vector<8x16xf32>
    %18 = tpu.matmul %6, %12, %cst_12 {dimension_numbers = #tpu.dot_dimension_numbers<[1], [0], [0], [1], [0, 0, 1, 1], [], []>} : vector<8x4xf32>, vector<4x16xf32>, vector<8x16xf32> -> vector<8x16xf32>
    %cst_13 = arith.constant dense<0.000000e+00> : vector<8x16xf32>
    %19 = tpu.matmul %4, %15, %cst_13 {dimension_numbers = #tpu.dot_dimension_numbers<[1], [0], [0], [1], [0, 0, 1, 1], [], []>} : vector<8x4xf32>, vector<4x16xf32>, vector<8x16xf32> -> vector<8x16xf32>
    %20 = arith.addf %18, %19 : vector<8x16xf32>
    %cst_14 = arith.constant dense<0.000000e+00> : vector<8x16xf32>
    %21 = tpu.matmul %8, %17, %cst_14 {dimension_numbers = #tpu.dot_dimension_numbers<[1], [0], [0], [1], [0, 0, 1, 1], [], []>} : vector<8x4xf32>, vector<4x16xf32>, vector<8x16xf32> -> vector<8x16xf32>
    %22 = arith.addf %20, %21 : vector<8x16xf32>
    %cst_15 = arith.constant dense<0.000000e+00> : vector<8xf32>
    %23 = vector.multi_reduction <add>, %22, %cst_15 [1] : vector<8x16xf32> to vector<8xf32>
    %24 = vector.shape_cast %23 : vector<8xf32> to vector<8x1xf32>
    %25 = arith.addf %9, %24 : vector<8x1xf32>
    %26 = arith.mulf %22, %22 : vector<8x16xf32>
    %cst_16 = arith.constant dense<0.000000e+00> : vector<8xf32>
    %27 = vector.multi_reduction <add>, %26, %cst_16 [1] : vector<8x16xf32> to vector<8xf32>
    %28 = vector.shape_cast %27 : vector<8xf32> to vector<8x1xf32>
    %29 = arith.addf %10, %28 : vector<8x1xf32>
    %c0_17 = arith.constant 0 : index
    %c0_18 = arith.constant 0 : index
    %30 = vector.load %arg5[%c0_17, %c0_18] : memref<8x2xf32, #tpu.memory_space<vmem>>, vector<8x2xf32>
    %31 = tpu.concatenate %25, %29 in 1 : vector<8x1xf32>, vector<8x1xf32> -> vector<8x2xf32>
    %32 = arith.addf %30, %31 : vector<8x2xf32>
    %c0_19 = arith.constant 0 : index
    %c0_20 = arith.constant 0 : index
    %33 = vector.load %arg5[%c0_19, %c0_20] : memref<8x2xf32, #tpu.memory_space<vmem>>, vector<8x2xf32>
    tpu.vector_store %arg5[%c0_19, %c0_20], %32 {strides = array<i32>} : memref<8x2xf32, #tpu.memory_space<vmem>>, vector<8x2xf32>,
    %c0_i32_21 = arith.constant 0 : i32
    %34 = arith.cmpi eq, %arg1, %c0_i32_21 : i32
    %35 = arith.extui %34 : i1 to i32
    %c0_i32_22 = arith.constant 0 : i32
    %36 = arith.cmpi ne, %35, %c0_i32_22 : i32
    scf.if %36 {
      %c0_23 = arith.constant 0 : index
      %c0_24 = arith.constant 0 : index
      %37 = vector.load %arg5[%c0_23, %c0_24] : memref<8x2xf32, #tpu.memory_space<vmem>>, vector<8x2xf32>
      %c0_25 = arith.constant 0 : index
      %c0_26 = arith.constant 0 : index
      %c0_27 = arith.constant 0 : index
      %38 = vector.load %arg4[%c0_25, %c0_26, %c0_27] : memref<1x8x2xf32, #tpu.memory_space<vmem>>, vector<1x8x2xf32>
      %39 = vector.shape_cast %38 : vector<1x8x2xf32> to vector<8x2xf32>
      %40 = vector.shape_cast %37 : vector<8x2xf32> to vector<1x8x2xf32>
      tpu.vector_store %arg4[%c0_25, %c0_26, %c0_27], %40 {strides = array<i32>} : memref<1x8x2xf32, #tpu.memory_space<vmem>>, vector<1x8x2xf32>,
    } else {
    }
    return
  }
  func.func @transform_0(%arg0: i32, %arg1: i32) -> (i32, i32, i32) {
    %c1_i32 = arith.constant 1 : i32
    %0 = arith.muli %arg0, %c1_i32 : i32
    %1 = arith.addi %0, %arg1 : i32
    %c0_i32 = arith.constant 0 : i32
    %c0_i32_0 = arith.constant 0 : i32
    %c0_i32_1 = arith.constant 0 : i32
    return %1, %c0_i32, %c0_i32_0 : i32, i32, i32
  }
  func.func @transform_1(%arg0: i32, %arg1: i32) -> (i32, i32, i32) {
    %c0_i32 = arith.constant 0 : i32
    %c0_i32_0 = arith.constant 0 : i32
    %c0_i32_1 = arith.constant 0 : i32
    %c0_i32_2 = arith.constant 0 : i32
    return %c0_i32, %c0_i32_0, %c0_i32_1 : i32, i32, i32
  }
  func.func @transform_2(%arg0: i32, %arg1: i32) -> (i32, i32, i32) {
    %c0_i32 = arith.constant 0 : i32
    %c0_i32_0 = arith.constant 0 : i32
    %c0_i32_1 = arith.constant 0 : i32
    return %arg0, %c0_i32, %c0_i32_0 : i32, i32, i32
  }
}

module attributes {stable_mosaic.version = 11 : i64} {
  func.func @_bn2_relu_kernel(%arg0: i32, %arg1: memref<1x8x16xf32, #tpu.memory_space<vmem>>, %arg2: memref<8x1xf32, #tpu.memory_space<vmem>>, %arg3: memref<8x1xf32, #tpu.memory_space<vmem>>, %arg4: memref<1x8x16xf32, #tpu.memory_space<vmem>>) attributes {dimension_semantics = [#tpu.dimension_semantics<parallel>], iteration_bounds = array<i64: 2>, scalar_prefetch = 0 : i64, scratch_operands = 0 : i64, tpu.core_type = #tpu.core_type<tc>, window_params = [{transform_indices = @transform_0, window_bounds = array<i64: 1, 8, 16>}, {pipeline_mode = #tpu.pipeline_mode<synchronous>, transform_indices = @transform_1, window_bounds = array<i64: 8, 1>}, {pipeline_mode = #tpu.pipeline_mode<synchronous>, transform_indices = @transform_2, window_bounds = array<i64: 8, 1>}, {transform_indices = @transform_3, window_bounds = array<i64: 1, 8, 16>}]} {
    %c0 = arith.constant 0 : index
    %c0_0 = arith.constant 0 : index
    %c0_1 = arith.constant 0 : index
    %0 = vector.load %arg1[%c0, %c0_0, %c0_1] : memref<1x8x16xf32, #tpu.memory_space<vmem>>, vector<1x8x16xf32>
    %c0_2 = arith.constant 0 : index
    %c0_3 = arith.constant 0 : index
    %1 = vector.load %arg2[%c0_2, %c0_3] : memref<8x1xf32, #tpu.memory_space<vmem>>, vector<8x1xf32>
    %2 = vector.shape_cast %1 : vector<8x1xf32> to vector<1x8x1xf32>
    %3 = vector.broadcast %2 : vector<1x8x1xf32> to vector<1x8x16xf32>
    %4 = arith.mulf %0, %3 : vector<1x8x16xf32>
    %c0_4 = arith.constant 0 : index
    %c0_5 = arith.constant 0 : index
    %5 = vector.load %arg3[%c0_4, %c0_5] : memref<8x1xf32, #tpu.memory_space<vmem>>, vector<8x1xf32>
    %6 = vector.shape_cast %5 : vector<8x1xf32> to vector<1x8x1xf32>
    %7 = vector.broadcast %6 : vector<1x8x1xf32> to vector<1x8x16xf32>
    %8 = arith.addf %4, %7 : vector<1x8x16xf32>
    %cst = arith.constant 0.000000e+00 : f32
    %9 = vector.broadcast %cst : f32 to vector<1x8x16xf32>
    %10 = arith.maximumf %8, %9 : vector<1x8x16xf32>
    %c0_6 = arith.constant 0 : index
    %c0_7 = arith.constant 0 : index
    %c0_8 = arith.constant 0 : index
    %11 = vector.load %arg4[%c0_6, %c0_7, %c0_8] : memref<1x8x16xf32, #tpu.memory_space<vmem>>, vector<1x8x16xf32>
    tpu.vector_store %arg4[%c0_6, %c0_7, %c0_8], %10 {strides = array<i32>} : memref<1x8x16xf32, #tpu.memory_space<vmem>>, vector<1x8x16xf32>,
    return
  }
  func.func @transform_0(%arg0: i32) -> (i32, i32, i32) {
    %c0_i32 = arith.constant 0 : i32
    %c0_i32_0 = arith.constant 0 : i32
    %c0_i32_1 = arith.constant 0 : i32
    return %arg0, %c0_i32, %c0_i32_0 : i32, i32, i32
  }
  func.func @transform_1(%arg0: i32) -> (i32, i32) {
    %c0_i32 = arith.constant 0 : i32
    %c0_i32_0 = arith.constant 0 : i32
    %c0_i32_1 = arith.constant 0 : i32
    return %c0_i32, %c0_i32_0 : i32, i32
  }
  func.func @transform_2(%arg0: i32) -> (i32, i32) {
    %c0_i32 = arith.constant 0 : i32
    %c0_i32_0 = arith.constant 0 : i32
    %c0_i32_1 = arith.constant 0 : i32
    return %c0_i32, %c0_i32_0 : i32, i32
  }
  func.func @transform_3(%arg0: i32) -> (i32, i32, i32) {
    %c0_i32 = arith.constant 0 : i32
    %c0_i32_0 = arith.constant 0 : i32
    %c0_i32_1 = arith.constant 0 : i32
    return %arg0, %c0_i32, %c0_i32_0 : i32, i32, i32
  }
}

module attributes {stable_mosaic.version = 11 : i64} {
  func.func @_bn1_conv2_stats_kernel(%arg0: i32, %arg1: i32, %arg2: memref<1x4x16xf32, #tpu.memory_space<vmem>>, %arg3: memref<3x8x4xf32, #tpu.memory_space<vmem>>, %arg4: memref<8x1xf32, #tpu.memory_space<vmem>>, %arg5: memref<8x1xf32, #tpu.memory_space<vmem>>, %arg6: memref<3x8x8xf32, #tpu.memory_space<vmem>>, %arg7: memref<1x8x16xf32, #tpu.memory_space<vmem>>, %arg8: memref<1x8x2xf32, #tpu.memory_space<vmem>>, %arg9: memref<8x2xf32, #tpu.memory_space<vmem>>) attributes {dimension_semantics = [#tpu.dimension_semantics<parallel>, #tpu.dimension_semantics<arbitrary>], iteration_bounds = array<i64: 2, 1>, scalar_prefetch = 0 : i64, scratch_operands = 1 : i64, tpu.core_type = #tpu.core_type<tc>, window_params = [{transform_indices = @transform_0, window_bounds = array<i64: 1, 4, 16>}, {pipeline_mode = #tpu.pipeline_mode<synchronous>, transform_indices = @transform_1, window_bounds = array<i64: 3, 8, 4>}, {pipeline_mode = #tpu.pipeline_mode<synchronous>, transform_indices = @transform_2, window_bounds = array<i64: 8, 1>}, {pipeline_mode = #tpu.pipeline_mode<synchronous>, transform_indices = @transform_3, window_bounds = array<i64: 8, 1>}, {pipeline_mode = #tpu.pipeline_mode<synchronous>, transform_indices = @transform_4, window_bounds = array<i64: 3, 8, 8>}, {transform_indices = @transform_5, window_bounds = array<i64: 1, 8, 16>}, {transform_indices = @transform_6, window_bounds = array<i64: 1, 8, 2>}]} {
    %c0_i32 = arith.constant 0 : i32
    %0 = arith.cmpi eq, %arg1, %c0_i32 : i32
    %1 = arith.extui %0 : i1 to i32
    %c0_i32_0 = arith.constant 0 : i32
    %2 = arith.cmpi ne, %1, %c0_i32_0 : i32
    scf.if %2 {
      %cst_44 = arith.constant 0.000000e+00 : f32
      %64 = vector.broadcast %cst_44 : f32 to vector<8x2xf32>
      %c0_45 = arith.constant 0 : index
      %c0_46 = arith.constant 0 : index
      %65 = vector.load %arg9[%c0_45, %c0_46] : memref<8x2xf32, #tpu.memory_space<vmem>>, vector<8x2xf32>
      tpu.vector_store %arg9[%c0_45, %c0_46], %64 {strides = array<i32>} : memref<8x2xf32, #tpu.memory_space<vmem>>, vector<8x2xf32>,
    } else {
    }
    %c0 = arith.constant 0 : index
    %c0_1 = arith.constant 0 : index
    %c0_2 = arith.constant 0 : index
    %3 = vector.load %arg3[%c0, %c0_1, %c0_2] : memref<3x8x4xf32, #tpu.memory_space<vmem>>, vector<1x8x4xf32>
    %4 = vector.shape_cast %3 : vector<1x8x4xf32> to vector<8x4xf32>
    %c1 = arith.constant 1 : index
    %c0_3 = arith.constant 0 : index
    %c0_4 = arith.constant 0 : index
    %5 = vector.load %arg3[%c1, %c0_3, %c0_4] : memref<3x8x4xf32, #tpu.memory_space<vmem>>, vector<1x8x4xf32>
    %6 = vector.shape_cast %5 : vector<1x8x4xf32> to vector<8x4xf32>
    %c2 = arith.constant 2 : index
    %c0_5 = arith.constant 0 : index
    %c0_6 = arith.constant 0 : index
    %7 = vector.load %arg3[%c2, %c0_5, %c0_6] : memref<3x8x4xf32, #tpu.memory_space<vmem>>, vector<1x8x4xf32>
    %8 = vector.shape_cast %7 : vector<1x8x4xf32> to vector<8x4xf32>
    %c0_7 = arith.constant 0 : index
    %c0_8 = arith.constant 0 : index
    %c0_9 = arith.constant 0 : index
    %9 = vector.load %arg6[%c0_7, %c0_8, %c0_9] : memref<3x8x8xf32, #tpu.memory_space<vmem>>, vector<1x8x8xf32>
    %10 = vector.shape_cast %9 : vector<1x8x8xf32> to vector<8x8xf32>
    %c1_10 = arith.constant 1 : index
    %c0_11 = arith.constant 0 : index
    %c0_12 = arith.constant 0 : index
    %11 = vector.load %arg6[%c1_10, %c0_11, %c0_12] : memref<3x8x8xf32, #tpu.memory_space<vmem>>, vector<1x8x8xf32>
    %12 = vector.shape_cast %11 : vector<1x8x8xf32> to vector<8x8xf32>
    %c2_13 = arith.constant 2 : index
    %c0_14 = arith.constant 0 : index
    %c0_15 = arith.constant 0 : index
    %13 = vector.load %arg6[%c2_13, %c0_14, %c0_15] : memref<3x8x8xf32, #tpu.memory_space<vmem>>, vector<1x8x8xf32>
    %14 = vector.shape_cast %13 : vector<1x8x8xf32> to vector<8x8xf32>
    %c0_16 = arith.constant 0 : index
    %c0_17 = arith.constant 0 : index
    %15 = vector.load %arg4[%c0_16, %c0_17] : memref<8x1xf32, #tpu.memory_space<vmem>>, vector<8x1xf32>
    %c0_18 = arith.constant 0 : index
    %c0_19 = arith.constant 0 : index
    %16 = vector.load %arg5[%c0_18, %c0_19] : memref<8x1xf32, #tpu.memory_space<vmem>>, vector<8x1xf32>
    %cst = arith.constant 0.000000e+00 : f32
    %17 = vector.broadcast %cst : f32 to vector<8x1xf32>
    %cst_20 = arith.constant 0.000000e+00 : f32
    %18 = vector.broadcast %cst_20 : f32 to vector<8x1xf32>
    %c0_21 = arith.constant 0 : index
    %c0_22 = arith.constant 0 : index
    %c0_23 = arith.constant 0 : index
    %19 = vector.load %arg2[%c0_21, %c0_22, %c0_23] : memref<1x4x16xf32, #tpu.memory_space<vmem>>, vector<1x4x16xf32>
    %20 = vector.shape_cast %19 : vector<1x4x16xf32> to vector<4x16xf32>
    %cst_24 = arith.constant 0.000000e+00 : f32
    %21 = vector.broadcast %cst_24 : f32 to vector<4x1xf32>
    %22 = vector.extract_strided_slice %20 {offsets = [0, 0], sizes = [4, 15], strides = [1, 1]} : vector<4x16xf32> to vector<4x15xf32>
    %23 = tpu.concatenate %21, %22 in 1 : vector<4x1xf32>, vector<4x15xf32> -> vector<4x16xf32>
    %24 = vector.extract_strided_slice %20 {offsets = [0, 1], sizes = [4, 15], strides = [1, 1]} : vector<4x16xf32> to vector<4x15xf32>
    %25 = tpu.concatenate %24, %21 in 1 : vector<4x15xf32>, vector<4x1xf32> -> vector<4x16xf32>
    %cst_25 = arith.constant dense<0.000000e+00> : vector<8x16xf32>
    %26 = tpu.matmul %6, %20, %cst_25 {dimension_numbers = #tpu.dot_dimension_numbers<[1], [0], [0], [1], [0, 0, 1, 1], [], []>} : vector<8x4xf32>, vector<4x16xf32>, vector<8x16xf32> -> vector<8x16xf32>
    %cst_26 = arith.constant dense<0.000000e+00> : vector<8x16xf32>
    %27 = tpu.matmul %4, %23, %cst_26 {dimension_numbers = #tpu.dot_dimension_numbers<[1], [0], [0], [1], [0, 0, 1, 1], [], []>} : vector<8x4xf32>, vector<4x16xf32>, vector<8x16xf32> -> vector<8x16xf32>
    %28 = arith.addf %26, %27 : vector<8x16xf32>
    %cst_27 = arith.constant dense<0.000000e+00> : vector<8x16xf32>
    %29 = tpu.matmul %8, %25, %cst_27 {dimension_numbers = #tpu.dot_dimension_numbers<[1], [0], [0], [1], [0, 0, 1, 1], [], []>} : vector<8x4xf32>, vector<4x16xf32>, vector<8x16xf32> -> vector<8x16xf32>
    %30 = arith.addf %28, %29 : vector<8x16xf32>
    %31 = vector.broadcast %15 : vector<8x1xf32> to vector<8x16xf32>
    %32 = arith.mulf %30, %31 : vector<8x16xf32>
    %33 = vector.broadcast %16 : vector<8x1xf32> to vector<8x16xf32>
    %34 = arith.addf %32, %33 : vector<8x16xf32>
    %cst_28 = arith.constant 0.000000e+00 : f32
    %35 = vector.broadcast %cst_28 : f32 to vector<8x16xf32>
    %36 = arith.maximumf %34, %35 : vector<8x16xf32>
    %cst_29 = arith.constant 0.000000e+00 : f32
    %37 = vector.broadcast %cst_29 : f32 to vector<8x1xf32>
    %38 = vector.extract_strided_slice %36 {offsets = [0, 0], sizes = [8, 15], strides = [1, 1]} : vector<8x16xf32> to vector<8x15xf32>
    %39 = tpu.concatenate %37, %38 in 1 : vector<8x1xf32>, vector<8x15xf32> -> vector<8x16xf32>
    %40 = vector.extract_strided_slice %36 {offsets = [0, 1], sizes = [8, 15], strides = [1, 1]} : vector<8x16xf32> to vector<8x15xf32>
    %41 = tpu.concatenate %40, %37 in 1 : vector<8x15xf32>, vector<8x1xf32> -> vector<8x16xf32>
    %cst_30 = arith.constant dense<0.000000e+00> : vector<8x16xf32>
    %42 = tpu.matmul %12, %36, %cst_30 {dimension_numbers = #tpu.dot_dimension_numbers<[1], [0], [0], [1], [0, 0, 1, 1], [], []>} : vector<8x8xf32>, vector<8x16xf32>, vector<8x16xf32> -> vector<8x16xf32>
    %cst_31 = arith.constant dense<0.000000e+00> : vector<8x16xf32>
    %43 = tpu.matmul %10, %39, %cst_31 {dimension_numbers = #tpu.dot_dimension_numbers<[1], [0], [0], [1], [0, 0, 1, 1], [], []>} : vector<8x8xf32>, vector<8x16xf32>, vector<8x16xf32> -> vector<8x16xf32>
    %44 = arith.addf %42, %43 : vector<8x16xf32>
    %cst_32 = arith.constant dense<0.000000e+00> : vector<8x16xf32>
    %45 = tpu.matmul %14, %41, %cst_32 {dimension_numbers = #tpu.dot_dimension_numbers<[1], [0], [0], [1], [0, 0, 1, 1], [], []>} : vector<8x8xf32>, vector<8x16xf32>, vector<8x16xf32> -> vector<8x16xf32>
    %46 = arith.addf %44, %45 : vector<8x16xf32>
    %c0_33 = arith.constant 0 : index
    %c0_34 = arith.constant 0 : index
    %c0_35 = arith.constant 0 : index
    %47 = vector.load %arg7[%c0_33, %c0_34, %c0_35] : memref<1x8x16xf32, #tpu.memory_space<vmem>>, vector<1x8x16xf32>
    %48 = vector.shape_cast %47 : vector<1x8x16xf32> to vector<8x16xf32>
    %49 = vector.shape_cast %46 : vector<8x16xf32> to vector<1x8x16xf32>
    tpu.vector_store %arg7[%c0_33, %c0_34, %c0_35], %49 {strides = array<i32>} : memref<1x8x16xf32, #tpu.memory_space<vmem>>, vector<1x8x16xf32>,
    %cst_36 = arith.constant dense<0.000000e+00> : vector<8xf32>
    %50 = vector.multi_reduction <add>, %46, %cst_36 [1] : vector<8x16xf32> to vector<8xf32>
    %51 = vector.shape_cast %50 : vector<8xf32> to vector<8x1xf32>
    %52 = arith.addf %17, %51 : vector<8x1xf32>
    %53 = arith.mulf %46, %46 : vector<8x16xf32>
    %cst_37 = arith.constant dense<0.000000e+00> : vector<8xf32>
    %54 = vector.multi_reduction <add>, %53, %cst_37 [1] : vector<8x16xf32> to vector<8xf32>
    %55 = vector.shape_cast %54 : vector<8xf32> to vector<8x1xf32>
    %56 = arith.addf %18, %55 : vector<8x1xf32>
    %c0_38 = arith.constant 0 : index
    %c0_39 = arith.constant 0 : index
    %57 = vector.load %arg9[%c0_38, %c0_39] : memref<8x2xf32, #tpu.memory_space<vmem>>, vector<8x2xf32>
    %58 = tpu.concatenate %52, %56 in 1 : vector<8x1xf32>, vector<8x1xf32> -> vector<8x2xf32>
    %59 = arith.addf %57, %58 : vector<8x2xf32>
    %c0_40 = arith.constant 0 : index
    %c0_41 = arith.constant 0 : index
    %60 = vector.load %arg9[%c0_40, %c0_41] : memref<8x2xf32, #tpu.memory_space<vmem>>, vector<8x2xf32>
    tpu.vector_store %arg9[%c0_40, %c0_41], %59 {strides = array<i32>} : memref<8x2xf32, #tpu.memory_space<vmem>>, vector<8x2xf32>,
    %c0_i32_42 = arith.constant 0 : i32
    %61 = arith.cmpi eq, %arg1, %c0_i32_42 : i32
    %62 = arith.extui %61 : i1 to i32
    %c0_i32_43 = arith.constant 0 : i32
    %63 = arith.cmpi ne, %62, %c0_i32_43 : i32
    scf.if %63 {
      %c0_44 = arith.constant 0 : index
      %c0_45 = arith.constant 0 : index
      %64 = vector.load %arg9[%c0_44, %c0_45] : memref<8x2xf32, #tpu.memory_space<vmem>>, vector<8x2xf32>
      %c0_46 = arith.constant 0 : index
      %c0_47 = arith.constant 0 : index
      %c0_48 = arith.constant 0 : index
      %65 = vector.load %arg8[%c0_46, %c0_47, %c0_48] : memref<1x8x2xf32, #tpu.memory_space<vmem>>, vector<1x8x2xf32>
      %66 = vector.shape_cast %65 : vector<1x8x2xf32> to vector<8x2xf32>
      %67 = vector.shape_cast %64 : vector<8x2xf32> to vector<1x8x2xf32>
      tpu.vector_store %arg8[%c0_46, %c0_47, %c0_48], %67 {strides = array<i32>} : memref<1x8x2xf32, #tpu.memory_space<vmem>>, vector<1x8x2xf32>,
    } else {
    }
    return
  }
  func.func @transform_0(%arg0: i32, %arg1: i32) -> (i32, i32, i32) {
    %c1_i32 = arith.constant 1 : i32
    %0 = arith.muli %arg0, %c1_i32 : i32
    %1 = arith.addi %0, %arg1 : i32
    %c0_i32 = arith.constant 0 : i32
    %c0_i32_0 = arith.constant 0 : i32
    %c0_i32_1 = arith.constant 0 : i32
    return %1, %c0_i32, %c0_i32_0 : i32, i32, i32
  }
  func.func @transform_1(%arg0: i32, %arg1: i32) -> (i32, i32, i32) {
    %c0_i32 = arith.constant 0 : i32
    %c0_i32_0 = arith.constant 0 : i32
    %c0_i32_1 = arith.constant 0 : i32
    %c0_i32_2 = arith.constant 0 : i32
    return %c0_i32, %c0_i32_0, %c0_i32_1 : i32, i32, i32
  }
  func.func @transform_2(%arg0: i32, %arg1: i32) -> (i32, i32) {
    %c0_i32 = arith.constant 0 : i32
    %c0_i32_0 = arith.constant 0 : i32
    %c0_i32_1 = arith.constant 0 : i32
    return %c0_i32, %c0_i32_0 : i32, i32
  }
  func.func @transform_3(%arg0: i32, %arg1: i32) -> (i32, i32) {
    %c0_i32 = arith.constant 0 : i32
    %c0_i32_0 = arith.constant 0 : i32
    %c0_i32_1 = arith.constant 0 : i32
    return %c0_i32, %c0_i32_0 : i32, i32
  }
  func.func @transform_4(%arg0: i32, %arg1: i32) -> (i32, i32, i32) {
    %c0_i32 = arith.constant 0 : i32
    %c0_i32_0 = arith.constant 0 : i32
    %c0_i32_1 = arith.constant 0 : i32
    %c0_i32_2 = arith.constant 0 : i32
    return %c0_i32, %c0_i32_0, %c0_i32_1 : i32, i32, i32
  }
  func.func @transform_5(%arg0: i32, %arg1: i32) -> (i32, i32, i32) {
    %c1_i32 = arith.constant 1 : i32
    %0 = arith.muli %arg0, %c1_i32 : i32
    %1 = arith.addi %0, %arg1 : i32
    %c0_i32 = arith.constant 0 : i32
    %c0_i32_0 = arith.constant 0 : i32
    %c0_i32_1 = arith.constant 0 : i32
    return %1, %c0_i32, %c0_i32_0 : i32, i32, i32
  }
  func.func @transform_6(%arg0: i32, %arg1: i32) -> (i32, i32, i32) {
    %c0_i32 = arith.constant 0 : i32
    %c0_i32_0 = arith.constant 0 : i32
    %c0_i32_1 = arith.constant 0 : i32
    return %arg0, %c0_i32, %c0_i32_0 : i32, i32, i32
  }
}

</mosaic_0001>

<llo_original>
// kernel: encoder_block.5
$region0: #{encoder_block.5}
  #allocation0 [shape = 'u32[]', space=smem, size = 0x4, offset = 0x4, fixed_abs, tag = 'smem constant byte address 0x4 - core index']
  #allocation1 [shape = 'u32[144,128]{1,0:T(1,128)}', space=vmem, size = 0x12000, scoped, tag = 'internal scratch']
  %s0 = inlined_call_operand.vmem [shape: f32[2,8,16], index: 0, kind: input, shape index: {}]
  %s1 = inlined_call_operand.vmem [shape: f32[8,1], index: 1, kind: input, shape index: {}]
  %s2 = inlined_call_operand.vmem [shape: f32[8,1], index: 2, kind: input, shape index: {}]
  %s3 = inlined_call_operand.vmem [shape: f32[2,8,16], index: 3, kind: output, shape index: {}]
  %s4 = sld [smem:[#allocation0]]
  $region45: #{encoder_block.5} parent=0
    _
  %s6 = ssub.s32 1, %s4
  %s7 = scalar_select 0, %s6, %s4
  loop: start=0, step=1, limit=4
  $region2: #{encoder_block.5} parent=0 // loop_pre_header
    _
  $region3: #{encoder_block.5} parent=0 // loop_header
    %s9 = sphi 0, %s13
    %p10 = scmp.ge.s32.totalorder %s9, 4
    %s19 = sphi 0, %s21
    %s22 = sphi 0, %s19
    %s23 = sphi 0, %s22
    %s39 = sphi 0, %s23
    %s43 = sphi 0, %s43
    %s45 = sphi 0, %s43
    %s46 = sphi 0, %s45
    %s60 = sphi 0, %s46
    %s64 = sphi 0, %s64
    %s66 = sphi 0, %s64
    %s67 = sphi 0, %s66
    %s81 = sphi 0, %s67
    %s87 = sphi 0, %s89
    %s90 = sphi 0, %s87
    %s91 = sphi 0, %s90
    %s107 = sphi 0, %s91
  $region4: #{encoder_block.5} parent=0 // loop_header_branch
    %12 = sbr.rel (%p10) target = $region8
  $region5: #{encoder_block.5} parent=0 // loop_body
    %s14 = ssub.s32 %s9, 1
    %s15 = ssub.s32 %s9, 2
    %s16 = sadd.s32 %s9, 1
    %s17 = ssub.s32 %s9, %s16
    %p18 = scmp.eq.s32.totalorder %s17, 0
    %s20 = sadd.s32 %s19, 1
    %s21 = scalar_select %p18, %s19, %s20
    %p24 = pneg %p18
    %p25 = scmp.eq.s32.totalorder %s9, 1
    %p26 = por %p24, %p25
    %p27 = scmp.ne.s32.totalorder %s19, %s22
    %p28 = scmp.eq.s32.totalorder %s9, 0
    %p29 = por %p27, %p28
    %p30 = scmp.ne.s32.totalorder %s19, %s22
    %p31 = scmp.eq.s32.totalorder %s14, 1
    %p32 = por %p30, %p31
    %p33 = scmp.ne.s32.totalorder %s22, %s23
    %p34 = scmp.eq.s32.totalorder %s14, 0
    %p35 = por %p33, %p34
    %p36 = scmp.ne.s32.totalorder %s22, %s23
    %p37 = scmp.eq.s32.totalorder %s15, 1
    %p38 = por %p36, %p37
    %p40 = scmp.ne.s32.totalorder %s23, %s39
    %p41 = scmp.eq.s32.totalorder %s15, 0
    %p42 = por %p40, %p41
    %s44 = sadd.s32 %s43, 1
    %p47 = scmp.eq.s32.totalorder %s9, 1
    %p48 = scmp.ne.s32.totalorder %s43, %s45
    %p49 = scmp.eq.s32.totalorder %s9, 0
    %p50 = por %p48, %p49
    %p51 = scmp.ne.s32.totalorder %s43, %s45
    %p52 = scmp.eq.s32.totalorder %s14, 1
    %p53 = por %p51, %p52
    %p54 = scmp.ne.s32.totalorder %s45, %s46
    %p55 = scmp.eq.s32.totalorder %s14, 0
    %p56 = por %p54, %p55
    %p57 = scmp.ne.s32.totalorder %s45, %s46
    %p58 = scmp.eq.s32.totalorder %s15, 1
    %p59 = por %p57, %p58
    %p61 = scmp.ne.s32.totalorder %s46, %s60
    %p62 = scmp.eq.s32.totalorder %s15, 0
    %p63 = por %p61, %p62
    %s65 = sadd.s32 %s64, 1
    %p68 = scmp.eq.s32.totalorder %s9, 1
    %p69 = scmp.ne.s32.totalorder %s64, %s66
    %p70 = scmp.eq.s32.totalorder %s9, 0
    %p71 = por %p69, %p70
    %p72 = scmp.ne.s32.totalorder %s64, %s66
    %p73 = scmp.eq.s32.totalorder %s14, 1
    %p74 = por %p72, %p73
    %p75 = scmp.ne.s32.totalorder %s66, %s67
    %p76 = scmp.eq.s32.totalorder %s14, 0
    %p77 = por %p75, %p76
    %p78 = scmp.ne.s32.totalorder %s66, %s67
    %p79 = scmp.eq.s32.totalorder %s15, 1
    %p80 = por %p78, %p79
    %p82 = scmp.ne.s32.totalorder %s67, %s81
    %p83 = scmp.eq.s32.totalorder %s15, 0
    %p84 = por %p82, %p83
    %s85 = ssub.s32 %s9, %s16
    %p86 = scmp.eq.s32.totalorder %s85, 0
    %s88 = sadd.s32 %s87, 1
    %s89 = scalar_select %p86, %s87, %s88
    %p92 = pneg %p86
    %p93 = scmp.eq.s32.totalorder %s9, 1
    %p94 = por %p92, %p93
    %p95 = scmp.ne.s32.totalorder %s87, %s90
    %p96 = scmp.eq.s32.totalorder %s9, 0
    %p97 = por %p95, %p96
    %p98 = scmp.ne.s32.totalorder %s87, %s90
    %p99 = scmp.eq.s32.totalorder %s14, 1
    %p100 = por %p98, %p99
    %p101 = scmp.ne.s32.totalorder %s90, %s91
    %p102 = scmp.eq.s32.totalorder %s14, 0
    %p103 = por %p101, %p102
    %p104 = scmp.ne.s32.totalorder %s90, %s91
    %p105 = scmp.eq.s32.totalorder %s15, 1
    %p106 = por %p104, %p105
    %p108 = scmp.ne.s32.totalorder %s91, %s107
    %p109 = scmp.eq.s32.totalorder %s15, 0
    %p110 = por %p108, %p109
    %p111 = scmp.le.s32.totalorder 1, %s9
    %p112 = scmp.lt.s32.totalorder %s9, 3
    %p113 = pnand %p111, %p112
    %p114 = pneg %p113
    // Predicated region
    $region9: #{encoder_block.5} parent=5 // pred_check
      _
    $region10: #{encoder_block.5} parent=5 // pred_check_branch
      %116 = sbr.rel (%p113) target = $region12
    $region11: #{encoder_block.5} parent=5 // pred_region
      %s117 = ssub.s32 %s9, 1
      // Predicated region
      $region13: #{encoder_block.5} parent=11 // pred_check
        %p118 = pneg %p56
      $region14: #{encoder_block.5} parent=11 // pred_check_branch
        %120 = sbr.rel (%p118) target = $region16
      $region15: #{encoder_block.5} parent=11 // pred_region
        _
      $region16: #{encoder_block.5} parent=11 // pred_fallthru
        _
      // Predicated region
      $region17: #{encoder_block.5} parent=11 // pred_check
        %p121 = pneg %p77
      $region18: #{encoder_block.5} parent=11 // pred_check_branch
        %123 = sbr.rel (%p121) target = $region20
      $region19: #{encoder_block.5} parent=11 // pred_region
        _
      $region20: #{encoder_block.5} parent=11 // pred_fallthru
        _
    $region12: #{encoder_block.5} parent=5 // pred_fallthru
      _
    %p124 = scmp.lt.s32.totalorder %s9, 2
    // Predicated region
    $region21: #{encoder_block.5} parent=5 // pred_check
      %p125 = pneg %p124
    $region22: #{encoder_block.5} parent=5 // pred_check_branch
      %127 = sbr.rel (%p125) target = $region24
    $region23: #{encoder_block.5} parent=5 // pred_region
      // Predicated region
      $region25: #{encoder_block.5} parent=23 // pred_check
        %p128 = pneg %p29
      $region26: #{encoder_block.5} parent=23 // pred_check_branch
        %130 = sbr.rel (%p128) target = $region28
      $region27: #{encoder_block.5} parent=23 // pred_region
        %p131 = scmp.lt.s32.totalorder %s9, 1
        %s132 = scalar_select %p131, %s9, 1
        %s133 = smul.addr %s132, 8
        %s134 = scalar_lea.vmem %s0, %s133
      $region28: #{encoder_block.5} parent=23 // pred_fallthru
        _
    $region24: #{encoder_block.5} parent=5 // pred_fallthru
      _
    %p135 = scmp.le.s32.totalorder 1, %s9
    %p136 = scmp.lt.s32.totalorder %s9, 3
    %p137 = pnand %p135, %p136
    %p138 = pneg %p137
    // Predicated region
    $region29: #{encoder_block.5} parent=5 // pred_check
      _
    $region30: #{encoder_block.5} parent=5 // pred_check_branch
      %140 = sbr.rel (%p137) target = $region32
    $region31: #{encoder_block.5} parent=5 // pred_region
      %s141 = ssub.s32 %s9, 1
      %p142 = scmp.lt.s32.totalorder %s14, 1
      %s143 = scalar_select %p142, %s14, 1
      %s144 = smul.addr %s143, 8
      %s145 = scalar_lea.vmem %s0, %s144
      %p146 = pneg %p35
      %p147 = pneg %p32
      %p148 = pneg %p56
      %p149 = pneg %p53
      %p150 = pneg %p77
      %p151 = pneg %p74
      %p152 = pneg %p103
      %p153 = pneg %p100
      %p154 = scmp.lt.s32.totalorder %s14, 1
      %s155 = scalar_select %p154, %s14, 1
      %s156 = smul.addr %s155, 8
      %s157 = scalar_lea.vmem %s3, %s156
      %p158 = scmp.lt.s32.totalorder %s14, 1
      %s159 = scalar_select %p158, %s14, 1
      %s160 = smul.addr %s159, 8
      %s161 = scalar_lea.vmem %s0, %s160
      %p162 = scmp.lt.s32.totalorder %s14, 1
      %s163 = scalar_select %p162, %s14, 1
      %s164 = smul.addr %s163, 8
      %s165 = scalar_lea.vmem %s3, %s164
      %v166 = vld [vmem:[%s161] sm:$0xff]
      %v167 = vld [vmem:[%s1] sm:$0xff]
      %169 = vset.pattern.permute.xlu0 0
      %170 = vperm.xlu0 %169, %v167
      %v171 = vpop.permute.xlu0 %170
      %v173 = vmul.f32 %v166, %v171
      %v174 = vld [vmem:[%s2] sm:$0xff]
      %176 = vset.pattern.permute.xlu0 0
      %177 = vperm.xlu0 %176, %v174
      %v178 = vpop.permute.xlu0 %177
      %v180 = vadd.f32 %v173, %v178
      %v181 = vmax.f32 %v180, 0.0
      %vm182 = vcmask 130048
      %183 = vst.msk [vmem:[%s165] sm:$0xff] %vm182, %v181
      %p184 = scmp.lt.s32.totalorder %s14, 1
      %s185 = scalar_select %p184, %s14, 1
      %s186 = smul.addr %s185, 8
      %s187 = scalar_lea.vmem %s3, %s186
      // Predicated region
      $region33: #{encoder_block.5} parent=31 // pred_check
        %p188 = pneg %p100
      $region34: #{encoder_block.5} parent=31 // pred_check_branch
        %190 = sbr.rel (%p188) target = $region36
      $region35: #{encoder_block.5} parent=31 // pred_region
        _
      $region36: #{encoder_block.5} parent=31 // pred_fallthru
        _
    $region32: #{encoder_block.5} parent=5 // pred_fallthru
      _
    %p191 = scmp.le.s32.totalorder 2, %s9
    // Predicated region
    $region37: #{encoder_block.5} parent=5 // pred_check
      %p192 = pneg %p191
    $region38: #{encoder_block.5} parent=5 // pred_check_branch
      %194 = sbr.rel (%p192) target = $region40
    $region39: #{encoder_block.5} parent=5 // pred_region
      %s195 = ssub.s32 %s9, 2
      // Predicated region
      $region41: #{encoder_block.5} parent=39 // pred_check
        %p196 = pneg %p106
      $region42: #{encoder_block.5} parent=39 // pred_check_branch
        %198 = sbr.rel (%p196) target = $region44
      $region43: #{encoder_block.5} parent=39 // pred_region
        %p199 = scmp.lt.s32.totalorder %s15, 1
        %s200 = scalar_select %p199, %s15, 1
        %s201 = smul.addr %s200, 8
        %s202 = scalar_lea.vmem %s3, %s201
      $region44: #{encoder_block.5} parent=39 // pred_fallthru
        _
    $region40: #{encoder_block.5} parent=5 // pred_fallthru
      _
  $region6: #{encoder_block.5} parent=0 // loop_footer
    %s13 = sadd.s32 1, %s9
  $region7: #{encoder_block.5} parent=0 // loop_footer_branch
    %8 = sbr.rel target = $region3
  $region8: #{encoder_block.5} parent=0 // loop_exit
    _

// kernel: encoder_block.3
$region0: #{encoder_block.3}
  #allocation0 [shape = 'u32[]', space=smem, size = 0x4, offset = 0x4, fixed_abs, tag = 'smem constant byte address 0x4 - core index']
  #allocation1 [shape = 'u32[144,128]{1,0:T(1,128)}', space=vmem, size = 0x12000, scoped, tag = 'internal scratch']
  #allocation2 [shape = 'f32[8,2]{1,0:T(8,128)}', space=vmem, size = 0x1000, scoped, tag = 'scratch operand']
  %s0 = inlined_call_operand.vmem [shape: f32[2,4,16], index: 0, kind: input, shape index: {}]
  %s1 = inlined_call_operand.vmem [shape: f32[3,8,4], index: 1, kind: input, shape index: {}]
  %s2 = inlined_call_operand.vmem [shape: f32[2,8,2], index: 2, kind: output, shape index: {}]
  %s3 = sld [smem:[#allocation0]]
  $region49: #{encoder_block.3} parent=0
    _
  %s5 = ssub.s32 1, %s3
  %s6 = scalar_select 0, %s5, %s3
  loop: start=0, step=1, limit=4
  $region2: #{encoder_block.3} parent=0 // loop_pre_header
    _
  $region3: #{encoder_block.3} parent=0 // loop_header
    %s8 = sphi 0, %s12
    %p9 = scmp.ge.s32.totalorder %s8, 4
    %s15 = sphi 0, %s27
    %s16 = sphi 0, %s23
    %s17 = sphi 0, %s15
    %s18 = sphi 0, %s16
    %s19 = sphi 0, %s17
    %s20 = sphi 0, %s18
    %s32 = sphi 0, %s34
    %s35 = sphi 0, %s32
    %s36 = sphi 0, %s35
    %s52 = sphi 0, %s36
    %s56 = sphi 0, %s56
    %s58 = sphi 0, %s56
    %s59 = sphi 0, %s58
    %s73 = sphi 0, %s59
    %s79 = sphi 0, %s81
    %s82 = sphi 0, %s79
    %s83 = sphi 0, %s82
    %s99 = sphi 0, %s83
  $region4: #{encoder_block.3} parent=0 // loop_header_branch
    %11 = sbr.rel (%p9) target = $region8
  $region5: #{encoder_block.3} parent=0 // loop_body
    %s13 = ssub.s32 %s8, 1
    %s14 = ssub.s32 %s8, 2
    %s21 = sadd.s32 1, %s16
    %p22 = scmp.ge.s32.totalorder %s21, 1
    %s23 = scalar_select %p22, 0, %s21
    %s24 = sadd.s32 1, %s15
    %s25 = scalar_select %p22, %s24, %s15
    %p26 = scmp.ge.s32.totalorder %s25, 2
    %s27 = scalar_select %p26, 0, %s25
    %s28 = sadd.s32 %s15, %s16
    %s29 = sadd.s32 %s27, %s23
    %s30 = ssub.s32 %s28, %s29
    %p31 = scmp.eq.s32.totalorder %s30, 0
    %s33 = sadd.s32 %s32, 1
    %s34 = scalar_select %p31, %s32, %s33
    %p37 = pneg %p31
    %p38 = scmp.eq.s32.totalorder %s8, 1
    %p39 = por %p37, %p38
    %p40 = scmp.ne.s32.totalorder %s32, %s35
    %p41 = scmp.eq.s32.totalorder %s8, 0
    %p42 = por %p40, %p41
    %p43 = scmp.ne.s32.totalorder %s32, %s35
    %p44 = scmp.eq.s32.totalorder %s13, 1
    %p45 = por %p43, %p44
    %p46 = scmp.ne.s32.totalorder %s35, %s36
    %p47 = scmp.eq.s32.totalorder %s13, 0
    %p48 = por %p46, %p47
    %p49 = scmp.ne.s32.totalorder %s35, %s36
    %p50 = scmp.eq.s32.totalorder %s14, 1
    %p51 = por %p49, %p50
    %p53 = scmp.ne.s32.totalorder %s36, %s52
    %p54 = scmp.eq.s32.totalorder %s14, 0
    %p55 = por %p53, %p54
    %s57 = sadd.s32 %s56, 1
    %p60 = scmp.eq.s32.totalorder %s8, 1
    %p61 = scmp.ne.s32.totalorder %s56, %s58
    %p62 = scmp.eq.s32.totalorder %s8, 0
    %p63 = por %p61, %p62
    %p64 = scmp.ne.s32.totalorder %s56, %s58
    %p65 = scmp.eq.s32.totalorder %s13, 1
    %p66 = por %p64, %p65
    %p67 = scmp.ne.s32.totalorder %s58, %s59
    %p68 = scmp.eq.s32.totalorder %s13, 0
    %p69 = por %p67, %p68
    %p70 = scmp.ne.s32.totalorder %s58, %s59
    %p71 = scmp.eq.s32.totalorder %s14, 1
    %p72 = por %p70, %p71
    %p74 = scmp.ne.s32.totalorder %s59, %s73
    %p75 = scmp.eq.s32.totalorder %s14, 0
    %p76 = por %p74, %p75
    %s77 = ssub.s32 %s15, %s27
    %p78 = scmp.eq.s32.totalorder %s77, 0
    %s80 = sadd.s32 %s79, 1
    %s81 = scalar_select %p78, %s79, %s80
    %p84 = pneg %p78
    %p85 = scmp.eq.s32.totalorder %s8, 1
    %p86 = por %p84, %p85
    %p87 = scmp.ne.s32.totalorder %s79, %s82
    %p88 = scmp.eq.s32.totalorder %s8, 0
    %p89 = por %p87, %p88
    %p90 = scmp.ne.s32.totalorder %s79, %s82
    %p91 = scmp.eq.s32.totalorder %s13, 1
    %p92 = por %p90, %p91
    %p93 = scmp.ne.s32.totalorder %s82, %s83
    %p94 = scmp.eq.s32.totalorder %s13, 0
    %p95 = por %p93, %p94
    %p96 = scmp.ne.s32.totalorder %s82, %s83
    %p97 = scmp.eq.s32.totalorder %s14, 1
    %p98 = por %p96, %p97
    %p100 = scmp.ne.s32.totalorder %s83, %s99
    %p101 = scmp.eq.s32.totalorder %s14, 0
    %p102 = por %p100, %p101
    %p103 = scmp.le.s32.totalorder 1, %s8
    %p104 = scmp.lt.s32.totalorder %s8, 3
    %p105 = pnand %p103, %p104
    %p106 = pneg %p105
    // Predicated region
    $region9: #{encoder_block.3} parent=5 // pred_check
      _
    $region10: #{encoder_block.3} parent=5 // pred_check_branch
      %108 = sbr.rel (%p105) target = $region12
    $region11: #{encoder_block.3} parent=5 // pred_region
      %s109 = ssub.s32 %s8, 1
      // Predicated region
      $region13: #{encoder_block.3} parent=11 // pred_check
        %p110 = pneg %p69
      $region14: #{encoder_block.3} parent=11 // pred_check_branch
        %112 = sbr.rel (%p110) target = $region16
      $region15: #{encoder_block.3} parent=11 // pred_region
        _
      $region16: #{encoder_block.3} parent=11 // pred_fallthru
        _
    $region12: #{encoder_block.3} parent=5 // pred_fallthru
      _
    %p113 = scmp.lt.s32.totalorder %s8, 2
    // Predicated region
    $region17: #{encoder_block.3} parent=5 // pred_check
      %p114 = pneg %p113
    $region18: #{encoder_block.3} parent=5 // pred_check_branch
      %116 = sbr.rel (%p114) target = $region20
    $region19: #{encoder_block.3} parent=5 // pred_region
      // Predicated region
      $region21: #{encoder_block.3} parent=19 // pred_check
        %p117 = pneg %p42
      $region22: #{encoder_block.3} parent=19 // pred_check_branch
        %119 = sbr.rel (%p117) target = $region24
      $region23: #{encoder_block.3} parent=19 // pred_region
        %s120 = sadd.s32 %s15, %s16
        %p121 = scmp.lt.s32.totalorder %s120, 1
        %s122 = scalar_select %p121, %s120, 1
        %s123 = smul.addr %s122, 4
        %s124 = scalar_lea.vmem %s0, %s123
        %s125 = sadd.s32 %s15, %s16
      $region24: #{encoder_block.3} parent=19 // pred_fallthru
        _
    $region20: #{encoder_block.3} parent=5 // pred_fallthru
      _
    %p126 = scmp.le.s32.totalorder 1, %s8
    %p127 = scmp.lt.s32.totalorder %s8, 3
    %p128 = pnand %p126, %p127
    %p129 = pneg %p128
    // Predicated region
    $region25: #{encoder_block.3} parent=5 // pred_check
      _
    $region26: #{encoder_block.3} parent=5 // pred_check_branch
      %131 = sbr.rel (%p128) target = $region28
    $region27: #{encoder_block.3} parent=5 // pred_region
      %s132 = ssub.s32 %s8, 1
      %s133 = sadd.s32 %s17, %s18
      %p134 = scmp.lt.s32.totalorder %s133, 1
      %s135 = scalar_select %p134, %s133, 1
      %s136 = smul.addr %s135, 4
      %s137 = scalar_lea.vmem %s0, %s136
      %p138 = pneg %p48
      %p139 = pneg %p45
      %p140 = pneg %p69
      %p141 = pneg %p66
      %p142 = pneg %p95
      %p143 = pneg %p92
      %p144 = scmp.lt.s32.totalorder %s17, 1
      %s145 = scalar_select %p144, %s17, 1
      %s146 = smul.addr %s145, 8
      %s147 = scalar_lea.vmem %s2, %s146
      %s148 = sadd.s32 %s17, %s18
      %p149 = scmp.lt.s32.totalorder %s148, 1
      %s150 = scalar_select %p149, %s148, 1
      %s151 = smul.addr %s150, 4
      %s152 = scalar_lea.vmem %s0, %s151
      %s153 = sadd.s32 %s17, %s18
      %p154 = scmp.lt.s32.totalorder %s17, 1
      %s155 = scalar_select %p154, %s17, 1
      %s156 = smul.addr %s155, 8
      %s157 = scalar_lea.vmem %s2, %s156
      %p158 = scmp.eq.s32.totalorder %s18, 0
      // Predicated region
      $region29: #{encoder_block.3} parent=27 // pred_check
        %p159 = pneg %p158
      $region30: #{encoder_block.3} parent=27 // pred_check_branch
        %161 = sbr.rel (%p159) target = $region32
      $region31: #{encoder_block.3} parent=27 // pred_region
        %vm162 = vcmask 15360
        %163 = vst.msk [vmem:[#allocation2] sm:$0xff] %vm162, 0.0
      $region32: #{encoder_block.3} parent=27 // pred_fallthru
        _
      %v164 = vld [vmem:[%s1] sm:$0xff]
      %s165 = scalar_lea.vmem %s1, 8
      %v166 = vld [vmem:[%s165] sm:$0xff]
      %s167 = scalar_lea.vmem %s1, 16
      %v168 = vld [vmem:[%s167] sm:$0xff]
      %v169 = vld [vmem:[%s152] sm:$0xf]
      %171 = vrot.lane.b32.xlu0 %v169, 1
      %v172 = vpop.permute.xlu0 %171
      %vm174 = vcmask 7168
      %v175 = vsel %vm174, 0.0, %v172
      %176 = vrot.lane.b32.xlu0 %v169, 127
      %v177 = vpop.permute.xlu0 %176
      %vm179 = vcmask 121856
      %v180 = vsel %vm179, %v177, 0.0
      %vm181 = vcmask 31744
      %v183 = vsel %vm181, %v164, 0
      %vm185 = vcmask 1043456
      %v187 = vsel %vm185, %v175, 0
      %189 = vmatprep.subr.mxu0 0.0
      %190 = vmatpush1.msra.mxu0 0.0
      %191 = vmatprep.subr.mxu0 0.0
      %192 = vmatpush1.msra.mxu0 0.0
      %193 = vmatprep.subr.mxu0 0.0
      %194 = vmatpush1.msra.mxu0 0.0
      %195 = vmatprep.subr.mxu0 0.0
      %196 = vmatpush1.msra.mxu0 0.0
      %197 = vmatprep.subr.mxu0 0.0
      %198 = vmatpush1.msra.mxu0 0.0
      %199 = vmatprep.subr.mxu0 0.0
      %200 = vmatpush1.msra.mxu0 0.0
      %201 = vmatprep.subr.mxu0 0.0
      %202 = vmatpush1.msra.mxu0 0.0
      %203 = vmatprep.subr.mxu0 0.0
      %204 = vmatpush1.msra.mxu0 0.0
      %205 = vmatprep.subr.mxu0 0.0
      %206 = vmatpush1.msra.mxu0 0.0
      %207 = vmatprep.subr.mxu0 0.0
      %208 = vmatpush1.msra.mxu0 0.0
      %209 = vmatprep.subr.mxu0 0.0
      %210 = vmatpush1.msra.mxu0 0.0
      %211 = vmatprep.subr.mxu0 0.0
      %212 = vmatpush1.msra.mxu0 0.0
      %213 = vmatprep.subr.mxu0 0.0
      %214 = vmatpush1.msra.mxu0 0.0
      %215 = vmatprep.subr.mxu0 0.0
      %216 = vmatpush1.msra.mxu0 0.0
      %217 = vmatprep.subr.mxu0 0.0
      %218 = vmatpush1.msra.mxu0 0.0
      %219 = vmatprep.subr.mxu0 0.0
      %220 = vmatpush1.msra.mxu0 %v187
      %221 = vmatprep.subr.mxu0 0.0
      %222 = vmatpush2.msra.mxu0 0.0
      %223 = vmatprep.subr.mxu0 0.0
      %224 = vmatpush2.msra.mxu0 0.0
      %225 = vmatprep.subr.mxu0 0.0
      %226 = vmatpush2.msra.mxu0 0.0
      %227 = vmatprep.subr.mxu0 0.0
      %228 = vmatpush2.msra.mxu0 0.0
      %229 = vmatprep.subr.mxu0 0.0
      %230 = vmatpush2.msra.mxu0 0.0
      %231 = vmatprep.subr.mxu0 0.0
      %232 = vmatpush2.msra.mxu0 0.0
      %233 = vmatprep.subr.mxu0 0.0
      %234 = vmatpush2.msra.mxu0 0.0
      %235 = vmatprep.subr.mxu0 0.0
      %236 = vmatpush2.msra.mxu0 0.0
      %237 = vmatprep.subr.mxu0 0.0
      %238 = vmatpush2.msra.mxu0 0.0
      %239 = vmatprep.subr.mxu0 0.0
      %240 = vmatpush2.msra.mxu0 0.0
      %241 = vmatprep.subr.mxu0 0.0
      %242 = vmatpush2.msra.mxu0 0.0
      %243 = vmatprep.subr.mxu0 0.0
      %244 = vmatpush2.msra.mxu0 0.0
      %245 = vmatprep.subr.mxu0 0.0
      %246 = vmatpush2.msra.mxu0 0.0
      %247 = vmatprep.subr.mxu0 0.0
      %248 = vmatpush2.msra.mxu0 0.0
      %249 = vmatprep.subr.mxu0 0.0
      %250 = vmatpush2.msra.mxu0 0.0
      %251 = vmatprep.subr.mxu0 0.0
      %252 = vmatpush2.msra.mxu0 0.0
      %253 = vmatprep.mubr.f32.mxu0 0.0
      %254 = vmatmul.mubr.f32.gmra.mxu0 %v183
      %v255 = vpop.f32.mrf.mxu0
      %v256 = vadd.f32 0.0, %v255
      %v257 = vpop.f32.mrf.mxu0
      %258 = vdwg.mxu0
      %v260 = vsel %vm181, %v166, 0
      %v262 = vsel %vm185, %v169, 0
      %264 = vmatprep.subr.mxu0 0.0
      %265 = vmatpush1.msra.mxu0 0.0
      %266 = vmatprep.subr.mxu0 0.0
      %267 = vmatpush1.msra.mxu0 0.0
      %268 = vmatprep.subr.mxu0 0.0
      %269 = vmatpush1.msra.mxu0 0.0
      %270 = vmatprep.subr.mxu0 0.0
      %271 = vmatpush1.msra.mxu0 0.0
      %272 = vmatprep.subr.mxu0 0.0
      %273 = vmatpush1.msra.mxu0 0.0
      %274 = vmatprep.subr.mxu0 0.0
      %275 = vmatpush1.msra.mxu0 0.0
      %276 = vmatprep.subr.mxu0 0.0
      %277 = vmatpush1.msra.mxu0 0.0
      %278 = vmatprep.subr.mxu0 0.0
      %279 = vmatpush1.msra.mxu0 0.0
      %280 = vmatprep.subr.mxu0 0.0
      %281 = vmatpush1.msra.mxu0 0.0
      %282 = vmatprep.subr.mxu0 0.0
      %283 = vmatpush1.msra.mxu0 0.0
      %284 = vmatprep.subr.mxu0 0.0
      %285 = vmatpush1.msra.mxu0 0.0
      %286 = vmatprep.subr.mxu0 0.0
      %287 = vmatpush1.msra.mxu0 0.0
      %288 = vmatprep.subr.mxu0 0.0
      %289 = vmatpush1.msra.mxu0 0.0
      %290 = vmatprep.subr.mxu0 0.0
      %291 = vmatpush1.msra.mxu0 0.0
      %292 = vmatprep.subr.mxu0 0.0
      %293 = vmatpush1.msra.mxu0 0.0
      %294 = vmatprep.subr.mxu0 0.0
      %295 = vmatpush1.msra.mxu0 %v262
      %296 = vmatprep.subr.mxu0 0.0
      %297 = vmatpush2.msra.mxu0 0.0
      %298 = vmatprep.subr.mxu0 0.0
      %299 = vmatpush2.msra.mxu0 0.0
      %300 = vmatprep.subr.mxu0 0.0
      %301 = vmatpush2.msra.mxu0 0.0
      %302 = vmatprep.subr.mxu0 0.0
      %303 = vmatpush2.msra.mxu0 0.0
      %304 = vmatprep.subr.mxu0 0.0
      %305 = vmatpush2.msra.mxu0 0.0
      %306 = vmatprep.subr.mxu0 0.0
      %307 = vmatpush2.msra.mxu0 0.0
      %308 = vmatprep.subr.mxu0 0.0
      %309 = vmatpush2.msra.mxu0 0.0
      %310 = vmatprep.subr.mxu0 0.0
      %311 = vmatpush2.msra.mxu0 0.0
      %312 = vmatprep.subr.mxu0 0.0
      %313 = vmatpush2.msra.mxu0 0.0
      %314 = vmatprep.subr.mxu0 0.0
      %315 = vmatpush2.msra.mxu0 0.0
      %316 = vmatprep.subr.mxu0 0.0
      %317 = vmatpush2.msra.mxu0 0.0
      %318 = vmatprep.subr.mxu0 0.0
      %319 = vmatpush2.msra.mxu0 0.0
      %320 = vmatprep.subr.mxu0 0.0
      %321 = vmatpush2.msra.mxu0 0.0
      %322 = vmatprep.subr.mxu0 0.0
      %323 = vmatpush2.msra.mxu0 0.0
      %324 = vmatprep.subr.mxu0 0.0
      %325 = vmatpush2.msra.mxu0 0.0
      %326 = vmatprep.subr.mxu0 0.0
      %327 = vmatpush2.msra.mxu0 0.0
      %328 = vmatprep.mubr.f32.mxu0 0.0
      %329 = vmatmul.mubr.f32.gmra.mxu0 %v260
      %v330 = vpop.f32.mrf.mxu0
      %v331 = vadd.f32 %v256, %v330
      %v332 = vpop.f32.mrf.mxu0
      %333 = vdwg.mxu0
      %v335 = vsel %vm181, %v168, 0
      %v338 = vsel %vm185, %v180, 0
      %340 = vmatprep.subr.mxu0 0.0
      %341 = vmatpush1.msra.mxu0 0.0
      %342 = vmatprep.subr.mxu0 0.0
      %343 = vmatpush1.msra.mxu0 0.0
      %344 = vmatprep.subr.mxu0 0.0
      %345 = vmatpush1.msra.mxu0 0.0
      %346 = vmatprep.subr.mxu0 0.0
      %347 = vmatpush1.msra.mxu0 0.0
      %348 = vmatprep.subr.mxu0 0.0
      %349 = vmatpush1.msra.mxu0 0.0
      %350 = vmatprep.subr.mxu0 0.0
      %351 = vmatpush1.msra.mxu0 0.0
      %352 = vmatprep.subr.mxu0 0.0
      %353 = vmatpush1.msra.mxu0 0.0
      %354 = vmatprep.subr.mxu0 0.0
      %355 = vmatpush1.msra.mxu0 0.0
      %356 = vmatprep.subr.mxu0 0.0
      %357 = vmatpush1.msra.mxu0 0.0
      %358 = vmatprep.subr.mxu0 0.0
      %359 = vmatpush1.msra.mxu0 0.0
      %360 = vmatprep.subr.mxu0 0.0
      %361 = vmatpush1.msra.mxu0 0.0
      %362 = vmatprep.subr.mxu0 0.0
      %363 = vmatpush1.msra.mxu0 0.0
      %364 = vmatprep.subr.mxu0 0.0
      %365 = vmatpush1.msra.mxu0 0.0
      %366 = vmatprep.subr.mxu0 0.0
      %367 = vmatpush1.msra.mxu0 0.0
      %368 = vmatprep.subr.mxu0 0.0
      %369 = vmatpush1.msra.mxu0 0.0
      %370 = vmatprep.subr.mxu0 0.0
      %371 = vmatpush1.msra.mxu0 %v338
      %372 = vmatprep.subr.mxu0 0.0
      %373 = vmatpush2.msra.mxu0 0.0
      %374 = vmatprep.subr.mxu0 0.0
      %375 = vmatpush2.msra.mxu0 0.0
      %376 = vmatprep.subr.mxu0 0.0
      %377 = vmatpush2.msra.mxu0 0.0
      %378 = vmatprep.subr.mxu0 0.0
      %379 = vmatpush2.msra.mxu0 0.0
      %380 = vmatprep.subr.mxu0 0.0
      %381 = vmatpush2.msra.mxu0 0.0
      %382 = vmatprep.subr.mxu0 0.0
      %383 = vmatpush2.msra.mxu0 0.0
      %384 = vmatprep.subr.mxu0 0.0
      %385 = vmatpush2.msra.mxu0 0.0
      %386 = vmatprep.subr.mxu0 0.0
      %387 = vmatpush2.msra.mxu0 0.0
      %388 = vmatprep.subr.mxu0 0.0
      %389 = vmatpush2.msra.mxu0 0.0
      %390 = vmatprep.subr.mxu0 0.0
      %391 = vmatpush2.msra.mxu0 0.0
      %392 = vmatprep.subr.mxu0 0.0
      %393 = vmatpush2.msra.mxu0 0.0
      %394 = vmatprep.subr.mxu0 0.0
      %395 = vmatpush2.msra.mxu0 0.0
      %396 = vmatprep.subr.mxu0 0.0
      %397 = vmatpush2.msra.mxu0 0.0
      %398 = vmatprep.subr.mxu0 0.0
      %399 = vmatpush2.msra.mxu0 0.0
      %400 = vmatprep.subr.mxu0 0.0
      %401 = vmatpush2.msra.mxu0 0.0
      %402 = vmatprep.subr.mxu0 0.0
      %403 = vmatpush2.msra.mxu0 0.0
      %404 = vmatprep.mubr.f32.mxu0 0.0
      %405 = vmatmul.mubr.f32.gmra.mxu0 %v335
      %v406 = vpop.f32.mrf.mxu0
      %v407 = vadd.f32 0.0, %v406
      %v408 = vpop.f32.mrf.mxu0
      %409 = vdwg.mxu0
      %v410 = vadd.f32 %v331, %v407
      %vm411 = vcmask 130048
      %v412 = vsel %vm411, %v410, 0.0
      %413 = vadd.xlane.f32.xlu0 %v412
      %v414 = vpop.xlane.xlu0 %413
      %v415 = vadd.f32 %v414, 0.0
      %v416 = vmul.f32 %v410, %v410
      %v417 = vsel %vm411, %v416, 0.0
      %418 = vadd.xlane.f32.xlu0 %v417
      %v419 = vpop.xlane.xlu0 %418
      %v420 = vadd.f32 %v419, 0.0
      %v421 = vld [vmem:[#allocation2] sm:$0xff]
      %v422 = vsel %vm174, %v415, %v420
      %v423 = vadd.f32 %v421, %v422
      %vm424 = vcmask 15360
      %425 = vst.msk [vmem:[#allocation2] sm:$0xff] %vm424, %v423
      // Predicated region
      $region33: #{encoder_block.3} parent=27 // pred_check
        %p426 = pneg %p158
      $region34: #{encoder_block.3} parent=27 // pred_check_branch
        %428 = sbr.rel (%p426) target = $region36
      $region35: #{encoder_block.3} parent=27 // pred_region
        %v429 = vld [vmem:[#allocation2] sm:$0xff]
        %430 = vst.msk [vmem:[%s157] sm:$0xff] %vm424, %v429
      $region36: #{encoder_block.3} parent=27 // pred_fallthru
        _
      %p431 = scmp.lt.s32.totalorder %s17, 1
      %s432 = scalar_select %p431, %s17, 1
      %s433 = smul.addr %s432, 8
      %s434 = scalar_lea.vmem %s2, %s433
      // Predicated region
      $region37: #{encoder_block.3} parent=27 // pred_check
        %p435 = pneg %p92
      $region38: #{encoder_block.3} parent=27 // pred_check_branch
        %437 = sbr.rel (%p435) target = $region40
      $region39: #{encoder_block.3} parent=27 // pred_region
        _
      $region40: #{encoder_block.3} parent=27 // pred_fallthru
        _
    $region28: #{encoder_block.3} parent=5 // pred_fallthru
      _
    %p438 = scmp.le.s32.totalorder 2, %s8
    // Predicated region
    $region41: #{encoder_block.3} parent=5 // pred_check
      %p439 = pneg %p438
    $region42: #{encoder_block.3} parent=5 // pred_check_branch
      %441 = sbr.rel (%p439) target = $region44
    $region43: #{encoder_block.3} parent=5 // pred_region
      %s442 = ssub.s32 %s8, 2
      // Predicated region
      $region45: #{encoder_block.3} parent=43 // pred_check
        %p443 = pneg %p98
      $region46: #{encoder_block.3} parent=43 // pred_check_branch
        %445 = sbr.rel (%p443) target = $region48
      $region47: #{encoder_block.3} parent=43 // pred_region
        %p446 = scmp.lt.s32.totalorder %s19, 1
        %s447 = scalar_select %p446, %s19, 1
        %s448 = smul.addr %s447, 8
        %s449 = scalar_lea.vmem %s2, %s448
      $region48: #{encoder_block.3} parent=43 // pred_fallthru
        _
    $region44: #{encoder_block.3} parent=5 // pred_fallthru
      _
  $region6: #{encoder_block.3} parent=0 // loop_footer
    %s12 = sadd.s32 1, %s8
  $region7: #{encoder_block.3} parent=0 // loop_footer_branch
    %7 = sbr.rel target = $region3
  $region8: #{encoder_block.3} parent=0 // loop_exit
    _

// kernel: encoder_block.4
$region0: #{encoder_block.4}
  #allocation0 [shape = 'u32[]', space=smem, size = 0x4, offset = 0x4, fixed_abs, tag = 'smem constant byte address 0x4 - core index']
  #allocation1 [shape = 'u32[144,128]{1,0:T(1,128)}', space=vmem, size = 0x12000, scoped, tag = 'internal scratch']
  #allocation2 [shape = 'f32[8,2]{1,0:T(8,128)}', space=vmem, size = 0x1000, scoped, tag = 'scratch operand']
  %s0 = inlined_call_operand.vmem [shape: f32[2,4,16], index: 0, kind: input, shape index: {}]
  %s1 = inlined_call_operand.vmem [shape: f32[3,8,4], index: 1, kind: input, shape index: {}]
  %s2 = inlined_call_operand.vmem [shape: f32[8,1], index: 2, kind: input, shape index: {}]
  %s3 = inlined_call_operand.vmem [shape: f32[8,1], index: 3, kind: input, shape index: {}]
  %s4 = inlined_call_operand.vmem [shape: f32[3,8,8], index: 4, kind: input, shape index: {}]
  %s5 = inlined_call_operand.vmem [shape: f32[2,8,16], index: 5, kind: output, shape index: {0}]
  %s6 = inlined_call_operand.vmem [shape: f32[2,8,2], index: 6, kind: output, shape index: {1}]
  %7 = xla_tuple %s5, %s6
  %s8 = sld [smem:[#allocation0]]
  $region69: #{encoder_block.4} parent=0
    _
  %s10 = ssub.s32 1, %s8
  %s11 = scalar_select 0, %s10, %s8
  loop: start=0, step=1, limit=4
  $region2: #{encoder_block.4} parent=0 // loop_pre_header
    _
  $region3: #{encoder_block.4} parent=0 // loop_header
    %s13 = sphi 0, %s17
    %p14 = scmp.ge.s32.totalorder %s13, 4
    %s20 = sphi 0, %s32
    %s21 = sphi 0, %s28
    %s22 = sphi 0, %s20
    %s23 = sphi 0, %s21
    %s24 = sphi 0, %s22
    %s25 = sphi 0, %s23
    %s37 = sphi 0, %s39
    %s40 = sphi 0, %s37
    %s41 = sphi 0, %s40
    %s57 = sphi 0, %s41
    %s61 = sphi 0, %s61
    %s63 = sphi 0, %s61
    %s64 = sphi 0, %s63
    %s78 = sphi 0, %s64
    %s82 = sphi 0, %s82
    %s84 = sphi 0, %s82
    %s85 = sphi 0, %s84
    %s99 = sphi 0, %s85
    %s103 = sphi 0, %s103
    %s105 = sphi 0, %s103
    %s106 = sphi 0, %s105
    %s120 = sphi 0, %s106
    %s124 = sphi 0, %s124
    %s126 = sphi 0, %s124
    %s127 = sphi 0, %s126
    %s141 = sphi 0, %s127
    %s149 = sphi 0, %s151
    %s152 = sphi 0, %s149
    %s153 = sphi 0, %s152
    %s169 = sphi 0, %s153
    %s175 = sphi 0, %s177
    %s178 = sphi 0, %s175
    %s179 = sphi 0, %s178
    %s195 = sphi 0, %s179
  $region4: #{encoder_block.4} parent=0 // loop_header_branch
    %16 = sbr.rel (%p14) target = $region8
  $region5: #{encoder_block.4} parent=0 // loop_body
    %s18 = ssub.s32 %s13, 1
    %s19 = ssub.s32 %s13, 2
    %s26 = sadd.s32 1, %s21
    %p27 = scmp.ge.s32.totalorder %s26, 1
    %s28 = scalar_select %p27, 0, %s26
    %s29 = sadd.s32 1, %s20
    %s30 = scalar_select %p27, %s29, %s20
    %p31 = scmp.ge.s32.totalorder %s30, 2
    %s32 = scalar_select %p31, 0, %s30
    %s33 = sadd.s32 %s20, %s21
    %s34 = sadd.s32 %s32, %s28
    %s35 = ssub.s32 %s33, %s34
    %p36 = scmp.eq.s32.totalorder %s35, 0
    %s38 = sadd.s32 %s37, 1
    %s39 = scalar_select %p36, %s37, %s38
    %p42 = pneg %p36
    %p43 = scmp.eq.s32.totalorder %s13, 1
    %p44 = por %p42, %p43
    %p45 = scmp.ne.s32.totalorder %s37, %s40
    %p46 = scmp.eq.s32.totalorder %s13, 0
    %p47 = por %p45, %p46
    %p48 = scmp.ne.s32.totalorder %s37, %s40
    %p49 = scmp.eq.s32.totalorder %s18, 1
    %p50 = por %p48, %p49
    %p51 = scmp.ne.s32.totalorder %s40, %s41
    %p52 = scmp.eq.s32.totalorder %s18, 0
    %p53 = por %p51, %p52
    %p54 = scmp.ne.s32.totalorder %s40, %s41
    %p55 = scmp.eq.s32.totalorder %s19, 1
    %p56 = por %p54, %p55
    %p58 = scmp.ne.s32.totalorder %s41, %s57
    %p59 = scmp.eq.s32.totalorder %s19, 0
    %p60 = por %p58, %p59
    %s62 = sadd.s32 %s61, 1
    %p65 = scmp.eq.s32.totalorder %s13, 1
    %p66 = scmp.ne.s32.totalorder %s61, %s63
    %p67 = scmp.eq.s32.totalorder %s13, 0
    %p68 = por %p66, %p67
    %p69 = scmp.ne.s32.totalorder %s61, %s63
    %p70 = scmp.eq.s32.totalorder %s18, 1
    %p71 = por %p69, %p70
    %p72 = scmp.ne.s32.totalorder %s63, %s64
    %p73 = scmp.eq.s32.totalorder %s18, 0
    %p74 = por %p72, %p73
    %p75 = scmp.ne.s32.totalorder %s63, %s64
    %p76 = scmp.eq.s32.totalorder %s19, 1
    %p77 = por %p75, %p76
    %p79 = scmp.ne.s32.totalorder %s64, %s78
    %p80 = scmp.eq.s32.totalorder %s19, 0
    %p81 = por %p79, %p80
    %s83 = sadd.s32 %s82, 1
    %p86 = scmp.eq.s32.totalorder %s13, 1
    %p87 = scmp.ne.s32.totalorder %s82, %s84
    %p88 = scmp.eq.s32.totalorder %s13, 0
    %p89 = por %p87, %p88
    %p90 = scmp.ne.s32.totalorder %s82, %s84
    %p91 = scmp.eq.s32.totalorder %s18, 1
    %p92 = por %p90, %p91
    %p93 = scmp.ne.s32.totalorder %s84, %s85
    %p94 = scmp.eq.s32.totalorder %s18, 0
    %p95 = por %p93, %p94
    %p96 = scmp.ne.s32.totalorder %s84, %s85
    %p97 = scmp.eq.s32.totalorder %s19, 1
    %p98 = por %p96, %p97
    %p100 = scmp.ne.s32.totalorder %s85, %s99
    %p101 = scmp.eq.s32.totalorder %s19, 0
    %p102 = por %p100, %p101
    %s104 = sadd.s32 %s103, 1
    %p107 = scmp.eq.s32.totalorder %s13, 1
    %p108 = scmp.ne.s32.totalorder %s103, %s105
    %p109 = scmp.eq.s32.totalorder %s13, 0
    %p110 = por %p108, %p109
    %p111 = scmp.ne.s32.totalorder %s103, %s105
    %p112 = scmp.eq.s32.totalorder %s18, 1
    %p113 = por %p111, %p112
    %p114 = scmp.ne.s32.totalorder %s105, %s106
    %p115 = scmp.eq.s32.totalorder %s18, 0
    %p116 = por %p114, %p115
    %p117 = scmp.ne.s32.totalorder %s105, %s106
    %p118 = scmp.eq.s32.totalorder %s19, 1
    %p119 = por %p117, %p118
    %p121 = scmp.ne.s32.totalorder %s106, %s120
    %p122 = scmp.eq.s32.totalorder %s19, 0
    %p123 = por %p121, %p122
    %s125 = sadd.s32 %s124, 1
    %p128 = scmp.eq.s32.totalorder %s13, 1
    %p129 = scmp.ne.s32.totalorder %s124, %s126
    %p130 = scmp.eq.s32.totalorder %s13, 0
    %p131 = por %p129, %p130
    %p132 = scmp.ne.s32.totalorder %s124, %s126
    %p133 = scmp.eq.s32.totalorder %s18, 1
    %p134 = por %p132, %p133
    %p135 = scmp.ne.s32.totalorder %s126, %s127
    %p136 = scmp.eq.s32.totalorder %s18, 0
    %p137 = por %p135, %p136
    %p138 = scmp.ne.s32.totalorder %s126, %s127
    %p139 = scmp.eq.s32.totalorder %s19, 1
    %p140 = por %p138, %p139
    %p142 = scmp.ne.s32.totalorder %s127, %s141
    %p143 = scmp.eq.s32.totalorder %s19, 0
    %p144 = por %p142, %p143
    %s145 = sadd.s32 %s20, %s21
    %s146 = sadd.s32 %s32, %s28
    %s147 = ssub.s32 %s145, %s146
    %p148 = scmp.eq.s32.totalorder %s147, 0
    %s150 = sadd.s32 %s149, 1
    %s151 = scalar_select %p148, %s149, %s150
    %p154 = pneg %p148
    %p155 = scmp.eq.s32.totalorder %s13, 1
    %p156 = por %p154, %p155
    %p157 = scmp.ne.s32.totalorder %s149, %s152
    %p158 = scmp.eq.s32.totalorder %s13, 0
    %p159 = por %p157, %p158
    %p160 = scmp.ne.s32.totalorder %s149, %s152
    %p161 = scmp.eq.s32.totalorder %s18, 1
    %p162 = por %p160, %p161
    %p163 = scmp.ne.s32.totalorder %s152, %s153
    %p164 = scmp.eq.s32.totalorder %s18, 0
    %p165 = por %p163, %p164
    %p166 = scmp.ne.s32.totalorder %s152, %s153
    %p167 = scmp.eq.s32.totalorder %s19, 1
    %p168 = por %p166, %p167
    %p170 = scmp.ne.s32.totalorder %s153, %s169
    %p171 = scmp.eq.s32.totalorder %s19, 0
    %p172 = por %p170, %p171
    %s173 = ssub.s32 %s20, %s32
    %p174 = scmp.eq.s32.totalorder %s173, 0
    %s176 = sadd.s32 %s175, 1
    %s177 = scalar_select %p174, %s175, %s176
    %p180 = pneg %p174
    %p181 = scmp.eq.s32.totalorder %s13, 1
    %p182 = por %p180, %p181
    %p183 = scmp.ne.s32.totalorder %s175, %s178
    %p184 = scmp.eq.s32.totalorder %s13, 0
    %p185 = por %p183, %p184
    %p186 = scmp.ne.s32.totalorder %s175, %s178
    %p187 = scmp.eq.s32.totalorder %s18, 1
    %p188 = por %p186, %p187
    %p189 = scmp.ne.s32.totalorder %s178, %s179
    %p190 = scmp.eq.s32.totalorder %s18, 0
    %p191 = por %p189, %p190
    %p192 = scmp.ne.s32.totalorder %s178, %s179
    %p193 = scmp.eq.s32.totalorder %s19, 1
    %p194 = por %p192, %p193
    %p196 = scmp.ne.s32.totalorder %s179, %s195
    %p197 = scmp.eq.s32.totalorder %s19, 0
    %p198 = por %p196, %p197
    %p199 = scmp.le.s32.totalorder 1, %s13
    %p200 = scmp.lt.s32.totalorder %s13, 3
    %p201 = pnand %p199, %p200
    %p202 = pneg %p201
    // Predicated region
    $region9: #{encoder_block.4} parent=5 // pred_check
      _
    $region10: #{encoder_block.4} parent=5 // pred_check_branch
      %204 = sbr.rel (%p201) target = $region12
    $region11: #{encoder_block.4} parent=5 // pred_region
      %s205 = ssub.s32 %s13, 1
      // Predicated region
      $region13: #{encoder_block.4} parent=11 // pred_check
        %p206 = pneg %p74
      $region14: #{encoder_block.4} parent=11 // pred_check_branch
        %208 = sbr.rel (%p206) target = $region16
      $region15: #{encoder_block.4} parent=11 // pred_region
        _
      $region16: #{encoder_block.4} parent=11 // pred_fallthru
        _
      // Predicated region
      $region17: #{encoder_block.4} parent=11 // pred_check
        %p209 = pneg %p95
      $region18: #{encoder_block.4} parent=11 // pred_check_branch
        %211 = sbr.rel (%p209) target = $region20
      $region19: #{encoder_block.4} parent=11 // pred_region
        _
      $region20: #{encoder_block.4} parent=11 // pred_fallthru
        _
      // Predicated region
      $region21: #{encoder_block.4} parent=11 // pred_check
        %p212 = pneg %p116
      $region22: #{encoder_block.4} parent=11 // pred_check_branch
        %214 = sbr.rel (%p212) target = $region24
      $region23: #{encoder_block.4} parent=11 // pred_region
        _
      $region24: #{encoder_block.4} parent=11 // pred_fallthru
        _
      // Predicated region
      $region25: #{encoder_block.4} parent=11 // pred_check
        %p215 = pneg %p137
      $region26: #{encoder_block.4} parent=11 // pred_check_branch
        %217 = sbr.rel (%p215) target = $region28
      $region27: #{encoder_block.4} parent=11 // pred_region
        _
      $region28: #{encoder_block.4} parent=11 // pred_fallthru
        _
    $region12: #{encoder_block.4} parent=5 // pred_fallthru
      _
    %p218 = scmp.lt.s32.totalorder %s13, 2
    // Predicated region
    $region29: #{encoder_block.4} parent=5 // pred_check
      %p219 = pneg %p218
    $region30: #{encoder_block.4} parent=5 // pred_check_branch
      %221 = sbr.rel (%p219) target = $region32
    $region31: #{encoder_block.4} parent=5 // pred_region
      // Predicated region
      $region33: #{encoder_block.4} parent=31 // pred_check
        %p222 = pneg %p47
      $region34: #{encoder_block.4} parent=31 // pred_check_branch
        %224 = sbr.rel (%p222) target = $region36
      $region35: #{encoder_block.4} parent=31 // pred_region
        %s225 = sadd.s32 %s20, %s21
        %p226 = scmp.lt.s32.totalorder %s225, 1
        %s227 = scalar_select %p226, %s225, 1
        %s228 = smul.addr %s227, 4
        %s229 = scalar_lea.vmem %s0, %s228
        %s230 = sadd.s32 %s20, %s21
      $region36: #{encoder_block.4} parent=31 // pred_fallthru
        _
    $region32: #{encoder_block.4} parent=5 // pred_fallthru
      _
    %p231 = scmp.le.s32.totalorder 1, %s13
    %p232 = scmp.lt.s32.totalorder %s13, 3
    %p233 = pnand %p231, %p232
    %p234 = pneg %p233
    // Predicated region
    $region37: #{encoder_block.4} parent=5 // pred_check
      _
    $region38: #{encoder_block.4} parent=5 // pred_check_branch
      %236 = sbr.rel (%p233) target = $region40
    $region39: #{encoder_block.4} parent=5 // pred_region
      %s237 = ssub.s32 %s13, 1
      %s238 = sadd.s32 %s22, %s23
      %p239 = scmp.lt.s32.totalorder %s238, 1
      %s240 = scalar_select %p239, %s238, 1
      %s241 = smul.addr %s240, 4
      %s242 = scalar_lea.vmem %s0, %s241
      %p243 = pneg %p53
      %p244 = pneg %p50
      %p245 = pneg %p74
      %p246 = pneg %p71
      %p247 = pneg %p95
      %p248 = pneg %p92
      %p249 = pneg %p116
      %p250 = pneg %p113
      %p251 = pneg %p137
      %p252 = pneg %p134
      %p253 = pneg %p165
      %p254 = pneg %p162
      %s255 = sadd.s32 %s22, %s23
      %p256 = scmp.lt.s32.totalorder %s255, 1
      %s257 = scalar_select %p256, %s255, 1
      %s258 = smul.addr %s257, 8
      %s259 = scalar_lea.vmem %s5, %s258
      %p260 = pneg %p191
      %p261 = pneg %p188
      %p262 = scmp.lt.s32.totalorder %s22, 1
      %s263 = scalar_select %p262, %s22, 1
      %s264 = smul.addr %s263, 8
      %s265 = scalar_lea.vmem %s6, %s264
      %s266 = sadd.s32 %s22, %s23
      %p267 = scmp.lt.s32.totalorder %s266, 1
      %s268 = scalar_select %p267, %s266, 1
      %s269 = smul.addr %s268, 4
      %s270 = scalar_lea.vmem %s0, %s269
      %s271 = sadd.s32 %s22, %s23
      %s272 = sadd.s32 %s22, %s23
      %p273 = scmp.lt.s32.totalorder %s272, 1
      %s274 = scalar_select %p273, %s272, 1
      %s275 = smul.addr %s274, 8
      %s276 = scalar_lea.vmem %s5, %s275
      %s277 = sadd.s32 %s22, %s23
      %p278 = scmp.lt.s32.totalorder %s22, 1
      %s279 = scalar_select %p278, %s22, 1
      %s280 = smul.addr %s279, 8
      %s281 = scalar_lea.vmem %s6, %s280
      %p282 = scmp.eq.s32.totalorder %s23, 0
      // Predicated region
      $region41: #{encoder_block.4} parent=39 // pred_check
        %p283 = pneg %p282
      $region42: #{encoder_block.4} parent=39 // pred_check_branch
        %285 = sbr.rel (%p283) target = $region44
      $region43: #{encoder_block.4} parent=39 // pred_region
        %vm286 = vcmask 15360
        %287 = vst.msk [vmem:[#allocation2] sm:$0xff] %vm286, 0.0
      $region44: #{encoder_block.4} parent=39 // pred_fallthru
        _
      %v288 = vld [vmem:[%s1] sm:$0xff]
      %s289 = scalar_lea.vmem %s1, 8
      %v290 = vld [vmem:[%s289] sm:$0xff]
      %s291 = scalar_lea.vmem %s1, 16
      %v292 = vld [vmem:[%s291] sm:$0xff]
      %v293 = vld [vmem:[%s4] sm:$0xff]
      %s294 = scalar_lea.vmem %s4, 8
      %v295 = vld [vmem:[%s294] sm:$0xff]
      %s296 = scalar_lea.vmem %s4, 16
      %v297 = vld [vmem:[%s296] sm:$0xff]
      %v298 = vld [vmem:[%s2] sm:$0xff]
      %v299 = vld [vmem:[%s3] sm:$0xff]
      %v300 = vld [vmem:[%s270] sm:$0xf]
      %302 = vrot.lane.b32.xlu0 %v300, 1
      %v303 = vpop.permute.xlu0 %302
      %vm305 = vcmask 7168
      %v306 = vsel %vm305, 0.0, %v303
      %307 = vrot.lane.b32.xlu0 %v300, 127
      %v308 = vpop.permute.xlu0 %307
      %vm310 = vcmask 121856
      %v311 = vsel %vm310, %v308, 0.0
      %vm312 = vcmask 31744
      %v314 = vsel %vm312, %v288, 0
      %vm316 = vcmask 1043456
      %v318 = vsel %vm316, %v306, 0
      %320 = vmatprep.subr.mxu0 0.0
      %321 = vmatpush1.msra.mxu0 0.0
      %322 = vmatprep.subr.mxu0 0.0
      %323 = vmatpush1.msra.mxu0 0.0
      %324 = vmatprep.subr.mxu0 0.0
      %325 = vmatpush1.msra.mxu0 0.0
      %326 = vmatprep.subr.mxu0 0.0
      %327 = vmatpush1.msra.mxu0 0.0
      %328 = vmatprep.subr.mxu0 0.0
      %329 = vmatpush1.msra.mxu0 0.0
      %330 = vmatprep.subr.mxu0 0.0
      %331 = vmatpush1.msra.mxu0 0.0
      %332 = vmatprep.subr.mxu0 0.0
      %333 = vmatpush1.msra.mxu0 0.0
      %334 = vmatprep.subr.mxu0 0.0
      %335 = vmatpush1.msra.mxu0 0.0
      %336 = vmatprep.subr.mxu0 0.0
      %337 = vmatpush1.msra.mxu0 0.0
      %338 = vmatprep.subr.mxu0 0.0
      %339 = vmatpush1.msra.mxu0 0.0
      %340 = vmatprep.subr.mxu0 0.0
      %341 = vmatpush1.msra.mxu0 0.0
      %342 = vmatprep.subr.mxu0 0.0
      %343 = vmatpush1.msra.mxu0 0.0
      %344 = vmatprep.subr.mxu0 0.0
      %345 = vmatpush1.msra.mxu0 0.0
      %346 = vmatprep.subr.mxu0 0.0
      %347 = vmatpush1.msra.mxu0 0.0
      %348 = vmatprep.subr.mxu0 0.0
      %349 = vmatpush1.msra.mxu0 0.0
      %350 = vmatprep.subr.mxu0 0.0
      %351 = vmatpush1.msra.mxu0 %v318
      %352 = vmatprep.subr.mxu0 0.0
      %353 = vmatpush2.msra.mxu0 0.0
      %354 = vmatprep.subr.mxu0 0.0
      %355 = vmatpush2.msra.mxu0 0.0
      %356 = vmatprep.subr.mxu0 0.0
      %357 = vmatpush2.msra.mxu0 0.0
      %358 = vmatprep.subr.mxu0 0.0
      %359 = vmatpush2.msra.mxu0 0.0
      %360 = vmatprep.subr.mxu0 0.0
      %361 = vmatpush2.msra.mxu0 0.0
      %362 = vmatprep.subr.mxu0 0.0
      %363 = vmatpush2.msra.mxu0 0.0
      %364 = vmatprep.subr.mxu0 0.0
      %365 = vmatpush2.msra.mxu0 0.0
      %366 = vmatprep.subr.mxu0 0.0
      %367 = vmatpush2.msra.mxu0 0.0
      %368 = vmatprep.subr.mxu0 0.0
      %369 = vmatpush2.msra.mxu0 0.0
      %370 = vmatprep.subr.mxu0 0.0
      %371 = vmatpush2.msra.mxu0 0.0
      %372 = vmatprep.subr.mxu0 0.0
      %373 = vmatpush2.msra.mxu0 0.0
      %374 = vmatprep.subr.mxu0 0.0
      %375 = vmatpush2.msra.mxu0 0.0
      %376 = vmatprep.subr.mxu0 0.0
      %377 = vmatpush2.msra.mxu0 0.0
      %378 = vmatprep.subr.mxu0 0.0
      %379 = vmatpush2.msra.mxu0 0.0
      %380 = vmatprep.subr.mxu0 0.0
      %381 = vmatpush2.msra.mxu0 0.0
      %382 = vmatprep.subr.mxu0 0.0
      %383 = vmatpush2.msra.mxu0 0.0
      %384 = vmatprep.mubr.f32.mxu0 0.0
      %385 = vmatmul.mubr.f32.gmra.mxu0 %v314
      %v386 = vpop.f32.mrf.mxu0
      %v387 = vadd.f32 0.0, %v386
      %v388 = vpop.f32.mrf.mxu0
      %389 = vdwg.mxu0
      %v391 = vsel %vm312, %v290, 0
      %v393 = vsel %vm316, %v300, 0
      %395 = vmatprep.subr.mxu0 0.0
      %396 = vmatpush1.msra.mxu0 0.0
      %397 = vmatprep.subr.mxu0 0.0
      %398 = vmatpush1.msra.mxu0 0.0
      %399 = vmatprep.subr.mxu0 0.0
      %400 = vmatpush1.msra.mxu0 0.0
      %401 = vmatprep.subr.mxu0 0.0
      %402 = vmatpush1.msra.mxu0 0.0
      %403 = vmatprep.subr.mxu0 0.0
      %404 = vmatpush1.msra.mxu0 0.0
      %405 = vmatprep.subr.mxu0 0.0
      %406 = vmatpush1.msra.mxu0 0.0
      %407 = vmatprep.subr.mxu0 0.0
      %408 = vmatpush1.msra.mxu0 0.0
      %409 = vmatprep.subr.mxu0 0.0
      %410 = vmatpush1.msra.mxu0 0.0
      %411 = vmatprep.subr.mxu0 0.0
      %412 = vmatpush1.msra.mxu0 0.0
      %413 = vmatprep.subr.mxu0 0.0
      %414 = vmatpush1.msra.mxu0 0.0
      %415 = vmatprep.subr.mxu0 0.0
      %416 = vmatpush1.msra.mxu0 0.0
      %417 = vmatprep.subr.mxu0 0.0
      %418 = vmatpush1.msra.mxu0 0.0
      %419 = vmatprep.subr.mxu0 0.0
      %420 = vmatpush1.msra.mxu0 0.0
      %421 = vmatprep.subr.mxu0 0.0
      %422 = vmatpush1.msra.mxu0 0.0
      %423 = vmatprep.subr.mxu0 0.0
      %424 = vmatpush1.msra.mxu0 0.0
      %425 = vmatprep.subr.mxu0 0.0
      %426 = vmatpush1.msra.mxu0 %v393
      %427 = vmatprep.subr.mxu0 0.0
      %428 = vmatpush2.msra.mxu0 0.0
      %429 = vmatprep.subr.mxu0 0.0
      %430 = vmatpush2.msra.mxu0 0.0
      %431 = vmatprep.subr.mxu0 0.0
      %432 = vmatpush2.msra.mxu0 0.0
      %433 = vmatprep.subr.mxu0 0.0
      %434 = vmatpush2.msra.mxu0 0.0
      %435 = vmatprep.subr.mxu0 0.0
      %436 = vmatpush2.msra.mxu0 0.0
      %437 = vmatprep.subr.mxu0 0.0
      %438 = vmatpush2.msra.mxu0 0.0
      %439 = vmatprep.subr.mxu0 0.0
      %440 = vmatpush2.msra.mxu0 0.0
      %441 = vmatprep.subr.mxu0 0.0
      %442 = vmatpush2.msra.mxu0 0.0
      %443 = vmatprep.subr.mxu0 0.0
      %444 = vmatpush2.msra.mxu0 0.0
      %445 = vmatprep.subr.mxu0 0.0
      %446 = vmatpush2.msra.mxu0 0.0
      %447 = vmatprep.subr.mxu0 0.0
      %448 = vmatpush2.msra.mxu0 0.0
      %449 = vmatprep.subr.mxu0 0.0
      %450 = vmatpush2.msra.mxu0 0.0
      %451 = vmatprep.subr.mxu0 0.0
      %452 = vmatpush2.msra.mxu0 0.0
      %453 = vmatprep.subr.mxu0 0.0
      %454 = vmatpush2.msra.mxu0 0.0
      %455 = vmatprep.subr.mxu0 0.0
      %456 = vmatpush2.msra.mxu0 0.0
      %457 = vmatprep.subr.mxu0 0.0
      %458 = vmatpush2.msra.mxu0 0.0
      %459 = vmatprep.mubr.f32.mxu0 0.0
      %460 = vmatmul.mubr.f32.gmra.mxu0 %v391
      %v461 = vpop.f32.mrf.mxu0
      %v462 = vadd.f32 %v387, %v461
      %v463 = vpop.f32.mrf.mxu0
      %464 = vdwg.mxu0
      %v466 = vsel %vm312, %v292, 0
      %v469 = vsel %vm316, %v311, 0
      %471 = vmatprep.subr.mxu0 0.0
      %472 = vmatpush1.msra.mxu0 0.0
      %473 = vmatprep.subr.mxu0 0.0
      %474 = vmatpush1.msra.mxu0 0.0
      %475 = vmatprep.subr.mxu0 0.0
      %476 = vmatpush1.msra.mxu0 0.0
      %477 = vmatprep.subr.mxu0 0.0
      %478 = vmatpush1.msra.mxu0 0.0
      %479 = vmatprep.subr.mxu0 0.0
      %480 = vmatpush1.msra.mxu0 0.0
      %481 = vmatprep.subr.mxu0 0.0
      %482 = vmatpush1.msra.mxu0 0.0
      %483 = vmatprep.subr.mxu0 0.0
      %484 = vmatpush1.msra.mxu0 0.0
      %485 = vmatprep.subr.mxu0 0.0
      %486 = vmatpush1.msra.mxu0 0.0
      %487 = vmatprep.subr.mxu0 0.0
      %488 = vmatpush1.msra.mxu0 0.0
      %489 = vmatprep.subr.mxu0 0.0
      %490 = vmatpush1.msra.mxu0 0.0
      %491 = vmatprep.subr.mxu0 0.0
      %492 = vmatpush1.msra.mxu0 0.0
      %493 = vmatprep.subr.mxu0 0.0
      %494 = vmatpush1.msra.mxu0 0.0
      %495 = vmatprep.subr.mxu0 0.0
      %496 = vmatpush1.msra.mxu0 0.0
      %497 = vmatprep.subr.mxu0 0.0
      %498 = vmatpush1.msra.mxu0 0.0
      %499 = vmatprep.subr.mxu0 0.0
      %500 = vmatpush1.msra.mxu0 0.0
      %501 = vmatprep.subr.mxu0 0.0
      %502 = vmatpush1.msra.mxu0 %v469
      %503 = vmatprep.subr.mxu0 0.0
      %504 = vmatpush2.msra.mxu0 0.0
      %505 = vmatprep.subr.mxu0 0.0
      %506 = vmatpush2.msra.mxu0 0.0
      %507 = vmatprep.subr.mxu0 0.0
      %508 = vmatpush2.msra.mxu0 0.0
      %509 = vmatprep.subr.mxu0 0.0
      %510 = vmatpush2.msra.mxu0 0.0
      %511 = vmatprep.subr.mxu0 0.0
      %512 = vmatpush2.msra.mxu0 0.0
      %513 = vmatprep.subr.mxu0 0.0
      %514 = vmatpush2.msra.mxu0 0.0
      %515 = vmatprep.subr.mxu0 0.0
      %516 = vmatpush2.msra.mxu0 0.0
      %517 = vmatprep.subr.mxu0 0.0
      %518 = vmatpush2.msra.mxu0 0.0
      %519 = vmatprep.subr.mxu0 0.0
      %520 = vmatpush2.msra.mxu0 0.0
      %521 = vmatprep.subr.mxu0 0.0
      %522 = vmatpush2.msra.mxu0 0.0
      %523 = vmatprep.subr.mxu0 0.0
      %524 = vmatpush2.msra.mxu0 0.0
      %525 = vmatprep.subr.mxu0 0.0
      %526 = vmatpush2.msra.mxu0 0.0
      %527 = vmatprep.subr.mxu0 0.0
      %528 = vmatpush2.msra.mxu0 0.0
      %529 = vmatprep.subr.mxu0 0.0
      %530 = vmatpush2.msra.mxu0 0.0
      %531 = vmatprep.subr.mxu0 0.0
      %532 = vmatpush2.msra.mxu0 0.0
      %533 = vmatprep.subr.mxu0 0.0
      %534 = vmatpush2.msra.mxu0 0.0
      %535 = vmatprep.mubr.f32.mxu0 0.0
      %536 = vmatmul.mubr.f32.gmra.mxu0 %v466
      %v537 = vpop.f32.mrf.mxu0
      %v538 = vadd.f32 0.0, %v537
      %v539 = vpop.f32.mrf.mxu0
      %540 = vdwg.mxu0
      %v541 = vadd.f32 %v462, %v538
      %543 = vset.pattern.permute.xlu0 0
      %544 = vperm.xlu0 %543, %v298
      %v545 = vpop.permute.xlu0 %544
      %v547 = vmul.f32 %v541, %v545
      %549 = vset.pattern.permute.xlu0 0
      %550 = vperm.xlu0 %549, %v299
      %v551 = vpop.permute.xlu0 %550
      %v553 = vadd.f32 %v547, %v551
      %v554 = vmax.f32 %v553, 0.0
      %556 = vrot.lane.b32.xlu0 %v554, 1
      %v557 = vpop.permute.xlu0 %556
      %v559 = vsel %vm305, 0.0, %v557
      %560 = vrot.lane.b32.xlu0 %v554, 127
      %v561 = vpop.permute.xlu0 %560
      %v563 = vsel %vm310, %v561, 0.0
      %vm564 = vcmask 64512
      %v566 = vsel %vm564, %v293, 0
      %568 = vmatprep.subr.mxu0 0.0
      %569 = vmatpush1.msra.mxu0 0.0
      %570 = vmatprep.subr.mxu0 0.0
      %571 = vmatpush1.msra.mxu0 0.0
      %572 = vmatprep.subr.mxu0 0.0
      %573 = vmatpush1.msra.mxu0 0.0
      %574 = vmatprep.subr.mxu0 0.0
      %575 = vmatpush1.msra.mxu0 0.0
      %576 = vmatprep.subr.mxu0 0.0
      %577 = vmatpush1.msra.mxu0 0.0
      %578 = vmatprep.subr.mxu0 0.0
      %579 = vmatpush1.msra.mxu0 0.0
      %580 = vmatprep.subr.mxu0 0.0
      %581 = vmatpush1.msra.mxu0 0.0
      %582 = vmatprep.subr.mxu0 0.0
      %583 = vmatpush1.msra.mxu0 0.0
      %584 = vmatprep.subr.mxu0 0.0
      %585 = vmatpush1.msra.mxu0 0.0
      %586 = vmatprep.subr.mxu0 0.0
      %587 = vmatpush1.msra.mxu0 0.0
      %588 = vmatprep.subr.mxu0 0.0
      %589 = vmatpush1.msra.mxu0 0.0
      %590 = vmatprep.subr.mxu0 0.0
      %591 = vmatpush1.msra.mxu0 0.0
      %592 = vmatprep.subr.mxu0 0.0
      %593 = vmatpush1.msra.mxu0 0.0
      %594 = vmatprep.subr.mxu0 0.0
      %595 = vmatpush1.msra.mxu0 0.0
      %596 = vmatprep.subr.mxu0 0.0
      %597 = vmatpush1.msra.mxu0 0.0
      %598 = vmatprep.subr.mxu0 0.0
      %599 = vmatpush1.msra.mxu0 %v559
      %600 = vmatprep.subr.mxu0 0.0
      %601 = vmatpush2.msra.mxu0 0.0
      %602 = vmatprep.subr.mxu0 0.0
      %603 = vmatpush2.msra.mxu0 0.0
      %604 = vmatprep.subr.mxu0 0.0
      %605 = vmatpush2.msra.mxu0 0.0
      %606 = vmatprep.subr.mxu0 0.0
      %607 = vmatpush2.msra.mxu0 0.0
      %608 = vmatprep.subr.mxu0 0.0
      %609 = vmatpush2.msra.mxu0 0.0
      %610 = vmatprep.subr.mxu0 0.0
      %611 = vmatpush2.msra.mxu0 0.0
      %612 = vmatprep.subr.mxu0 0.0
      %613 = vmatpush2.msra.mxu0 0.0
      %614 = vmatprep.subr.mxu0 0.0
      %615 = vmatpush2.msra.mxu0 0.0
      %616 = vmatprep.subr.mxu0 0.0
      %617 = vmatpush2.msra.mxu0 0.0
      %618 = vmatprep.subr.mxu0 0.0
      %619 = vmatpush2.msra.mxu0 0.0
      %620 = vmatprep.subr.mxu0 0.0
      %621 = vmatpush2.msra.mxu0 0.0
      %622 = vmatprep.subr.mxu0 0.0
      %623 = vmatpush2.msra.mxu0 0.0
      %624 = vmatprep.subr.mxu0 0.0
      %625 = vmatpush2.msra.mxu0 0.0
      %626 = vmatprep.subr.mxu0 0.0
      %627 = vmatpush2.msra.mxu0 0.0
      %628 = vmatprep.subr.mxu0 0.0
      %629 = vmatpush2.msra.mxu0 0.0
      %630 = vmatprep.subr.mxu0 0.0
      %631 = vmatpush2.msra.mxu0 0.0
      %632 = vmatprep.mubr.f32.mxu0 0.0
      %633 = vmatmul.mubr.f32.gmra.mxu0 %v566
      %v634 = vpop.f32.mrf.mxu0
      %v635 = vadd.f32 0.0, %v634
      %v636 = vpop.f32.mrf.mxu0
      %637 = vdwg.mxu0
      %v639 = vsel %vm564, %v295, 0
      %641 = vmatprep.subr.mxu0 0.0
      %642 = vmatpush1.msra.mxu0 0.0
      %643 = vmatprep.subr.mxu0 0.0
      %644 = vmatpush1.msra.mxu0 0.0
      %645 = vmatprep.subr.mxu0 0.0
      %646 = vmatpush1.msra.mxu0 0.0
      %647 = vmatprep.subr.mxu0 0.0
      %648 = vmatpush1.msra.mxu0 0.0
      %649 = vmatprep.subr.mxu0 0.0
      %650 = vmatpush1.msra.mxu0 0.0
      %651 = vmatprep.subr.mxu0 0.0
      %652 = vmatpush1.msra.mxu0 0.0
      %653 = vmatprep.subr.mxu0 0.0
      %654 = vmatpush1.msra.mxu0 0.0
      %655 = vmatprep.subr.mxu0 0.0
      %656 = vmatpush1.msra.mxu0 0.0
      %657 = vmatprep.subr.mxu0 0.0
      %658 = vmatpush1.msra.mxu0 0.0
      %659 = vmatprep.subr.mxu0 0.0
      %660 = vmatpush1.msra.mxu0 0.0
      %661 = vmatprep.subr.mxu0 0.0
      %662 = vmatpush1.msra.mxu0 0.0
      %663 = vmatprep.subr.mxu0 0.0
      %664 = vmatpush1.msra.mxu0 0.0
      %665 = vmatprep.subr.mxu0 0.0
      %666 = vmatpush1.msra.mxu0 0.0
      %667 = vmatprep.subr.mxu0 0.0
      %668 = vmatpush1.msra.mxu0 0.0
      %669 = vmatprep.subr.mxu0 0.0
      %670 = vmatpush1.msra.mxu0 0.0
      %671 = vmatprep.subr.mxu0 0.0
      %672 = vmatpush1.msra.mxu0 %v554
      %673 = vmatprep.subr.mxu0 0.0
      %674 = vmatpush2.msra.mxu0 0.0
      %675 = vmatprep.subr.mxu0 0.0
      %676 = vmatpush2.msra.mxu0 0.0
      %677 = vmatprep.subr.mxu0 0.0
      %678 = vmatpush2.msra.mxu0 0.0
      %679 = vmatprep.subr.mxu0 0.0
      %680 = vmatpush2.msra.mxu0 0.0
      %681 = vmatprep.subr.mxu0 0.0
      %682 = vmatpush2.msra.mxu0 0.0
      %683 = vmatprep.subr.mxu0 0.0
      %684 = vmatpush2.msra.mxu0 0.0
      %685 = vmatprep.subr.mxu0 0.0
      %686 = vmatpush2.msra.mxu0 0.0
      %687 = vmatprep.subr.mxu0 0.0
      %688 = vmatpush2.msra.mxu0 0.0
      %689 = vmatprep.subr.mxu0 0.0
      %690 = vmatpush2.msra.mxu0 0.0
      %691 = vmatprep.subr.mxu0 0.0
      %692 = vmatpush2.msra.mxu0 0.0
      %693 = vmatprep.subr.mxu0 0.0
      %694 = vmatpush2.msra.mxu0 0.0
      %695 = vmatprep.subr.mxu0 0.0
      %696 = vmatpush2.msra.mxu0 0.0
      %697 = vmatprep.subr.mxu0 0.0
      %698 = vmatpush2.msra.mxu0 0.0
      %699 = vmatprep.subr.mxu0 0.0
      %700 = vmatpush2.msra.mxu0 0.0
      %701 = vmatprep.subr.mxu0 0.0
      %702 = vmatpush2.msra.mxu0 0.0
      %703 = vmatprep.subr.mxu0 0.0
      %704 = vmatpush2.msra.mxu0 0.0
      %705 = vmatprep.mubr.f32.mxu0 0.0
      %706 = vmatmul.mubr.f32.gmra.mxu0 %v639
      %v707 = vpop.f32.mrf.mxu0
      %v708 = vadd.f32 %v635, %v707
      %v709 = vpop.f32.mrf.mxu0
      %710 = vdwg.mxu0
      %v712 = vsel %vm564, %v297, 0
      %714 = vmatprep.subr.mxu0 0.0
      %715 = vmatpush1.msra.mxu0 0.0
      %716 = vmatprep.subr.mxu0 0.0
      %717 = vmatpush1.msra.mxu0 0.0
      %718 = vmatprep.subr.mxu0 0.0
      %719 = vmatpush1.msra.mxu0 0.0
      %720 = vmatprep.subr.mxu0 0.0
      %721 = vmatpush1.msra.mxu0 0.0
      %722 = vmatprep.subr.mxu0 0.0
      %723 = vmatpush1.msra.mxu0 0.0
      %724 = vmatprep.subr.mxu0 0.0
      %725 = vmatpush1.msra.mxu0 0.0
      %726 = vmatprep.subr.mxu0 0.0
      %727 = vmatpush1.msra.mxu0 0.0
      %728 = vmatprep.subr.mxu0 0.0
      %729 = vmatpush1.msra.mxu0 0.0
      %730 = vmatprep.subr.mxu0 0.0
      %731 = vmatpush1.msra.mxu0 0.0
      %732 = vmatprep.subr.mxu0 0.0
      %733 = vmatpush1.msra.mxu0 0.0
      %734 = vmatprep.subr.mxu0 0.0
      %735 = vmatpush1.msra.mxu0 0.0
      %736 = vmatprep.subr.mxu0 0.0
      %737 = vmatpush1.msra.mxu0 0.0
      %738 = vmatprep.subr.mxu0 0.0
      %739 = vmatpush1.msra.mxu0 0.0
      %740 = vmatprep.subr.mxu0 0.0
      %741 = vmatpush1.msra.mxu0 0.0
      %742 = vmatprep.subr.mxu0 0.0
      %743 = vmatpush1.msra.mxu0 0.0
      %744 = vmatprep.subr.mxu0 0.0
      %745 = vmatpush1.msra.mxu0 %v563
      %746 = vmatprep.subr.mxu0 0.0
      %747 = vmatpush2.msra.mxu0 0.0
      %748 = vmatprep.subr.mxu0 0.0
      %749 = vmatpush2.msra.mxu0 0.0
      %750 = vmatprep.subr.mxu0 0.0
      %751 = vmatpush2.msra.mxu0 0.0
      %752 = vmatprep.subr.mxu0 0.0
      %753 = vmatpush2.msra.mxu0 0.0
      %754 = vmatprep.subr.mxu0 0.0
      %755 = vmatpush2.msra.mxu0 0.0
      %756 = vmatprep.subr.mxu0 0.0
      %757 = vmatpush2.msra.mxu0 0.0
      %758 = vmatprep.subr.mxu0 0.0
      %759 = vmatpush2.msra.mxu0 0.0
      %760 = vmatprep.subr.mxu0 0.0
      %761 = vmatpush2.msra.mxu0 0.0
      %762 = vmatprep.subr.mxu0 0.0
      %763 = vmatpush2.msra.mxu0 0.0
      %764 = vmatprep.subr.mxu0 0.0
      %765 = vmatpush2.msra.mxu0 0.0
      %766 = vmatprep.subr.mxu0 0.0
      %767 = vmatpush2.msra.mxu0 0.0
      %768 = vmatprep.subr.mxu0 0.0
      %769 = vmatpush2.msra.mxu0 0.0
      %770 = vmatprep.subr.mxu0 0.0
      %771 = vmatpush2.msra.mxu0 0.0
      %772 = vmatprep.subr.mxu0 0.0
      %773 = vmatpush2.msra.mxu0 0.0
      %774 = vmatprep.subr.mxu0 0.0
      %775 = vmatpush2.msra.mxu0 0.0
      %776 = vmatprep.subr.mxu0 0.0
      %777 = vmatpush2.msra.mxu0 0.0
      %778 = vmatprep.mubr.f32.mxu0 0.0
      %779 = vmatmul.mubr.f32.gmra.mxu0 %v712
      %v780 = vpop.f32.mrf.mxu0
      %v781 = vadd.f32 0.0, %v780
      %v782 = vpop.f32.mrf.mxu0
      %783 = vdwg.mxu0
      %v784 = vadd.f32 %v708, %v781
      %vm785 = vcmask 130048
      %786 = vst.msk [vmem:[%s276] sm:$0xff] %vm785, %v784
      %v787 = vsel %vm785, %v784, 0.0
      %788 = vadd.xlane.f32.xlu0 %v787
      %v789 = vpop.xlane.xlu0 %788
      %v790 = vadd.f32 %v789, 0.0
      %v791 = vmul.f32 %v784, %v784
      %v792 = vsel %vm785, %v791, 0.0
      %793 = vadd.xlane.f32.xlu0 %v792
      %v794 = vpop.xlane.xlu0 %793
      %v795 = vadd.f32 %v794, 0.0
      %v796 = vld [vmem:[#allocation2] sm:$0xff]
      %v797 = vsel %vm305, %v790, %v795
      %v798 = vadd.f32 %v796, %v797
      %vm799 = vcmask 15360
      %800 = vst.msk [vmem:[#allocation2] sm:$0xff] %vm799, %v798
      // Predicated region
      $region45: #{encoder_block.4} parent=39 // pred_check
        %p801 = pneg %p282
      $region46: #{encoder_block.4} parent=39 // pred_check_branch
        %803 = sbr.rel (%p801) target = $region48
      $region47: #{encoder_block.4} parent=39 // pred_region
        %v804 = vld [vmem:[#allocation2] sm:$0xff]
        %805 = vst.msk [vmem:[%s281] sm:$0xff] %vm799, %v804
      $region48: #{encoder_block.4} parent=39 // pred_fallthru
        _
      %s806 = sadd.s32 %s22, %s23
      %p807 = scmp.lt.s32.totalorder %s806, 1
      %s808 = scalar_select %p807, %s806, 1
      %s809 = smul.addr %s808, 8
      %s810 = scalar_lea.vmem %s5, %s809
      %p811 = scmp.lt.s32.totalorder %s22, 1
      %s812 = scalar_select %p811, %s22, 1
      %s813 = smul.addr %s812, 8
      %s814 = scalar_lea.vmem %s6, %s813
      // Predicated region
      $region49: #{encoder_block.4} parent=39 // pred_check
        %p815 = pneg %p162
      $region50: #{encoder_block.4} parent=39 // pred_check_branch
        %817 = sbr.rel (%p815) target = $region52
      $region51: #{encoder_block.4} parent=39 // pred_region
        %s818 = sadd.s32 %s22, %s23
      $region52: #{encoder_block.4} parent=39 // pred_fallthru
        _
      // Predicated region
      $region53: #{encoder_block.4} parent=39 // pred_check
        %p819 = pneg %p188
      $region54: #{encoder_block.4} parent=39 // pred_check_branch
        %821 = sbr.rel (%p819) target = $region56
      $region55: #{encoder_block.4} parent=39 // pred_region
        _
      $region56: #{encoder_block.4} parent=39 // pred_fallthru
        _
    $region40: #{encoder_block.4} parent=5 // pred_fallthru
      _
    %p822 = scmp.le.s32.totalorder 2, %s13
    // Predicated region
    $region57: #{encoder_block.4} parent=5 // pred_check
      %p823 = pneg %p822
    $region58: #{encoder_block.4} parent=5 // pred_check_branch
      %825 = sbr.rel (%p823) target = $region60
    $region59: #{encoder_block.4} parent=5 // pred_region
      %s826 = ssub.s32 %s13, 2
      // Predicated region
      $region61: #{encoder_block.4} parent=59 // pred_check
        %p827 = pneg %p168
      $region62: #{encoder_block.4} parent=59 // pred_check_branch
        %829 = sbr.rel (%p827) target = $region64
      $region63: #{encoder_block.4} parent=59 // pred_region
        %s830 = sadd.s32 %s24, %s25
        %p831 = scmp.lt.s32.totalorder %s830, 1
        %s832 = scalar_select %p831, %s830, 1
        %s833 = smul.addr %s832, 8
        %s834 = scalar_lea.vmem %s5, %s833
      $region64: #{encoder_block.4} parent=59 // pred_fallthru
        _
      // Predicated region
      $region65: #{encoder_block.4} parent=59 // pred_check
        %p835 = pneg %p194
      $region66: #{encoder_block.4} parent=59 // pred_check_branch
        %837 = sbr.rel (%p835) target = $region68
      $region67: #{encoder_block.4} parent=59 // pred_region
        %p838 = scmp.lt.s32.totalorder %s24, 1
        %s839 = scalar_select %p838, %s24, 1
        %s840 = smul.addr %s839, 8
        %s841 = scalar_lea.vmem %s6, %s840
      $region68: #{encoder_block.4} parent=59 // pred_fallthru
        _
    $region60: #{encoder_block.4} parent=5 // pred_fallthru
      _
  $region6: #{encoder_block.4} parent=0 // loop_footer
    %s17 = sadd.s32 1, %s13
  $region7: #{encoder_block.4} parent=0 // loop_footer_branch
    %12 = sbr.rel target = $region3
  $region8: #{encoder_block.4} parent=0 // loop_exit
    _

</llo_original>
